<compile_context>
chip_gen: v7x
topology: tpu7x:2x2x1
jax: 0.10.0
libtpu: 0.0.40
codegen_flags: <defaults>
</compile_context>

<pallas_src>
import jax
import jax.numpy as jnp
from jax import lax
from jax.experimental import pallas as pl
from jax.experimental.pallas import tpu as pltpu


def lstm_kernel(x_ref, lens_ref, w_ih_ref, w_hh_ref, b_ref, out_ref, xw_scr, c_scr):
    """One grid point = one (batch-shard, time-chunk).

    x_ref   : (Tc*Bs, E)  time-chunk of inputs, timesteps stacked along sublanes
    lens_ref: (Bs, 1)     per-row sequence lengths (int32)
    w_ih_ref: (E, 4H)     input->gates weight (pre-transposed)
    w_hh_ref: (H, 4H)     hidden->gates weight (pre-transposed)
    b_ref   : (1, 4H)     fused bias (b_ih + b_hh)
    out_ref : (Bs, H)     resident across the time axis -> doubles as the h carry
    xw_scr  : (Tc*Bs, 4H) per-chunk hoisted input projection
    c_scr   : (Bs, H)     c carry across time chunks
    """
    t_blk = pl.program_id(1)
    TB, _ = x_ref.shape
    Bs, H = out_ref.shape
    G = 4 * H
    Tc = TB // Bs                                      # static (shapes are static)

    # ---- first chunk of each batch shard: reset the carried state ----
    @pl.when(t_blk == 0)
    def _():
        out_ref[...] = jnp.zeros_like(out_ref)
        c_scr[...] = jnp.zeros_like(c_scr)

    # ---- Phase 1: hoisted input projection for this chunk (one MXU matmul) ----
    xw_scr[...] = (
        jnp.dot(x_ref[...], w_ih_ref[...], preferred_element_type=jnp.float32)
        + b_ref[...]
    )

    # ---- Loop invariants (hoisted out of the serial recurrence) ----
    # TODO(synk): W_hh could be pinned in the MXU weight registers across the unrolled
    # recurrence via pltpu.matmul_push_rhs / matmul_acc_lhs / matmul_pop to drop ~Tc-1
    # weight pushes from the serial path; kept as jnp.dot here (loop-invariant operand).
    w_hh = w_hh_ref[...]                               # (H, 4H)
    len_vec = lens_ref[...]                            # (Bs, 1) int32
    lane = lax.broadcasted_iota(jnp.int32, (Bs, G), 1)
    is_g = (lane >= 2 * H) & (lane < 3 * H)            # lanes of the tanh ("g") gate
    # sigmoid(x) = 0.5*(1 + tanh(x/2)): per-lane scale/shift, hoisted (VPU-only per step)
    act_scale = jnp.where(is_g, 1.0, 0.5).astype(jnp.float32)
    act_shift = jnp.where(is_g, 0.0, 0.5).astype(jnp.float32)
    t_base = t_blk * Tc                                # absolute timestep offset

    def step(t, carry):
        h, c = carry
        off = pl.multiple_of(t * Bs, Bs)               # sublane-aligned row offset
        gates = xw_scr[pl.ds(off, Bs), :] + jnp.dot(
            h, w_hh, preferred_element_type=jnp.float32)           # (Bs, 4H)

        # Single EUP pass: tanh on the g block, tanh-based sigmoid on i/f/o blocks.
        th = jnp.tanh(gates * act_scale)
        act = th * act_scale + act_shift

        i = act[:, 0 * H:1 * H]
        f = act[:, 1 * H:2 * H]
        g = act[:, 2 * H:3 * H]
        o = act[:, 3 * H:4 * H]

        c_new = f * c + i * g
        h_new = o * jnp.tanh(c_new)

        # pack_padded_sequence semantics: freeze h once the sequence has ended.
        # (c needs no freeze: it only feeds h_new values the h-mask discards.)
        valid = (t_base + t) < len_vec                 # (Bs, 1) -> broadcast over H
        return jnp.where(valid, h_new, h), c_new

    # Unroll bounded by the chunk size (Tc <= 8), not the full sequence length.
    h, c = lax.fori_loop(0, Tc, step, (out_ref[...], c_scr[...]), unroll=True)
    out_ref[...] = h
    c_scr[...] = c


def lstm_forward(x, lens, w_ih_t, w_hh_t, b, *, t_chunk=8):
    """x: (T, B, E) f32; lens: (B,) int; w_ih_t: (E, 4H); w_hh_t: (H, 4H); b: (1, 4H)."""
    T, B, E = x.shape
    H = w_hh_t.shape[0]
    G = 4 * H

    # Batch: pad to the 8-sublane width; for B > 8 split into 2 shards so the "parallel"
    # grid axis can use v7x's second TensorCore (no-op on v5e/v6e and for tiny B).
    # Padded rows get len=0 so they stay frozen at their zero init.
    SUB = 8
    n_bshard = 2 if B > SUB else 1
    Bp = ((B + SUB * n_bshard - 1) // (SUB * n_bshard)) * (SUB * n_bshard)
    Bs = Bp // n_bshard

    # Time: chunk so the hoisted-projection scratch stays O(Tc*Bs*4H) and the
    # auto-pipeline double-buffers x chunks. Padded timesteps freeze h (t >= len).
    Tc = min(t_chunk, T)
    Tp = ((T + Tc - 1) // Tc) * Tc
    n_tc = Tp // Tc

    x_p = jnp.pad(x, ((0, Tp - T), (0, Bp - B), (0, 0)))
    lens_p = jnp.pad(lens.astype(jnp.int32), (0, Bp - B))

    # Shard-major layout: (Tp, Bp, E) -> (n_bshard, Tp*Bs, E), so one time chunk of one
    # shard is a contiguous (Tc*Bs, E) slab (single matmul operand, no in-kernel reshape).
    x_sh = (x_p.reshape(Tp, n_bshard, Bs, E)
               .transpose(1, 0, 2, 3)
               .reshape(n_bshard, Tp * Bs, E))
    lens_sh = lens_p.reshape(n_bshard, Bs, 1)

    out = pl.pallas_call(
        lstm_kernel,
        out_shape=jax.ShapeDtypeStruct((n_bshard, Bs, H), jnp.float32),
        grid_spec=pltpu.PrefetchScalarGridSpec(
            num_scalar_prefetch=0,
            grid=(n_bshard, n_tc),                                         # (parallel, arbitrary)
            in_specs=[
                pl.BlockSpec((None, Tc * Bs, E), lambda bi, ti: (bi, ti, 0)),  # x chunk
                pl.BlockSpec((None, Bs, 1), lambda bi, ti: (bi, 0, 0)),        # lengths
                pl.BlockSpec((E, G), lambda bi, ti: (0, 0)),                   # W_ih^T
                pl.BlockSpec((H, G), lambda bi, ti: (0, 0)),                   # W_hh^T
                pl.BlockSpec((1, G), lambda bi, ti: (0, 0)),                   # fused bias
            ],
            out_specs=pl.BlockSpec((None, Bs, H), lambda bi, ti: (bi, 0, 0)),  # h carry
            scratch_shapes=[
                pltpu.VMEM((Tc * Bs, G), jnp.float32),   # per-chunk x @ W_ih + b
                pltpu.VMEM((Bs, H), jnp.float32),        # c carry across time chunks
            ],
        ),
        compiler_params=pltpu.CompilerParams(
            dimension_semantics=("parallel", "arbitrary")),
    )(x_sh, lens_sh, w_ih_t, w_hh_t, b)

    return out.reshape(Bp, H)[:B]


def lstm_ref(x, lens, w_ih_t, w_hh_t, b):
    """Pure-JAX reference with identical semantics (for the correctness check)."""
    T, B, E = x.shape
    H = w_hh_t.shape[0]
    h = jnp.zeros((B, H), jnp.float32)
    c = jnp.zeros((B, H), jnp.float32)
    for t in range(T):
        gates = x[t] @ w_ih_t + h @ w_hh_t + b
        i = jax.nn.sigmoid(gates[:, :H])
        f = jax.nn.sigmoid(gates[:, H:2 * H])
        g = jnp.tanh(gates[:, 2 * H:3 * H])
        o = jax.nn.sigmoid(gates[:, 3 * H:])
        c_new = f * c + i * g
        h_new = o * jnp.tanh(c_new)
        valid = (t < lens).reshape(B, 1)
        h = jnp.where(valid, h_new, h)
        c = jnp.where(valid, c_new, c)
    return h


if __name__ == "__main__":
    # config = {'b_size': 2, 'emb_dim': 16, 'lstm_dim': 32}, seq_len T = 8
    T, B, E, H = 8, 2, 16, 32

    key = jax.random.PRNGKey(0)
    kx, kwi, kwh, kbi, kbh = jax.random.split(key, 5)

    # Inputs: padded sentence embeddings (T, B, E) and per-sentence lengths.
    x = jax.random.normal(kx, (T, B, E), dtype=jnp.float32)
    lens = jnp.array([8, 5], dtype=jnp.int32)

    # Deterministic parameter init mimicking nn.LSTM: U(-1/sqrt(H), 1/sqrt(H)).
    bound = 1.0 / (H ** 0.5)
    weight_ih = jax.random.uniform(kwi, (4 * H, E), jnp.float32, -bound, bound)
    weight_hh = jax.random.uniform(kwh, (4 * H, H), jnp.float32, -bound, bound)
    bias_ih = jax.random.uniform(kbi, (4 * H,), jnp.float32, -bound, bound)
    bias_hh = jax.random.uniform(kbh, (4 * H,), jnp.float32, -bound, bound)

    # Kernel-friendly layouts: pre-transpose weights, fuse the two biases.
    w_ih_t = weight_ih.T                      # (E, 4H)
    w_hh_t = weight_hh.T                      # (H, 4H)
    b = (bias_ih + bias_hh).reshape(1, 4 * H)

    emb = lstm_forward(x, lens, w_ih_t, w_hh_t, b)
    emb = jax.block_until_ready(emb)

    ref = lstm_ref(x, lens, w_ih_t, w_hh_t, b)
    assert emb.shape == (B, H)
    # Tolerance-based (the in-kernel sigmoid uses 0.5*(1+tanh(x/2)); few-ULP difference).
    assert jnp.allclose(emb, ref, atol=1e-4, rtol=1e-4)

    print("KERNEL_OK")
</pallas_src>

<mosaic_0001>
module attributes {stable_mosaic.version = 11 : i64} {
  func.func @lstm_kernel(%arg0: i32, %arg1: i32, %arg2: memref<1x64x16xf32, #tpu.memory_space<vmem>>, %arg3: memref<1x8x1xi32, #tpu.memory_space<vmem>>, %arg4: memref<16x128xf32, #tpu.memory_space<vmem>>, %arg5: memref<32x128xf32, #tpu.memory_space<vmem>>, %arg6: memref<1x128xf32, #tpu.memory_space<vmem>>, %arg7: memref<1x8x32xf32, #tpu.memory_space<vmem>>, %arg8: memref<64x128xf32, #tpu.memory_space<vmem>>, %arg9: memref<8x32xf32, #tpu.memory_space<vmem>>) attributes {dimension_semantics = [#tpu.dimension_semantics<parallel>, #tpu.dimension_semantics<arbitrary>], iteration_bounds = array<i64: 1, 1>, scalar_prefetch = 0 : i64, scratch_operands = 2 : i64, tpu.core_type = #tpu.core_type<tc>, window_params = [{transform_indices = @transform_0, window_bounds = array<i64: 1, 64, 16>}, {transform_indices = @transform_1, window_bounds = array<i64: 1, 8, 1>}, {pipeline_mode = #tpu.pipeline_mode<synchronous>, transform_indices = @transform_2, window_bounds = array<i64: 16, 128>}, {pipeline_mode = #tpu.pipeline_mode<synchronous>, transform_indices = @transform_3, window_bounds = array<i64: 32, 128>}, {pipeline_mode = #tpu.pipeline_mode<synchronous>, transform_indices = @transform_4, window_bounds = array<i64: 1, 128>}, {transform_indices = @transform_5, window_bounds = array<i64: 1, 8, 32>}]} {
    %c0_i32 = arith.constant 0 : i32
    %0 = arith.cmpi eq, %arg1, %c0_i32 : i32
    %1 = arith.extui %0 : i1 to i32
    %c0_i32_0 = arith.constant 0 : i32
    %2 = arith.cmpi ne, %1, %c0_i32_0 : i32
    scf.if %2 {
      %cst_54 = arith.constant 0.000000e+00 : f32
      %234 = vector.broadcast %cst_54 : f32 to vector<8x32xf32>
      %c0_55 = arith.constant 0 : index
      %c0_56 = arith.constant 0 : index
      %c0_57 = arith.constant 0 : index
      %235 = vector.load %arg7[%c0_55, %c0_56, %c0_57] : memref<1x8x32xf32, #tpu.memory_space<vmem>>, vector<1x8x32xf32>
      %236 = vector.shape_cast %235 : vector<1x8x32xf32> to vector<8x32xf32>
      %237 = vector.shape_cast %234 : vector<8x32xf32> to vector<1x8x32xf32>
      tpu.vector_store %arg7[%c0_55, %c0_56, %c0_57], %237 {strides = array<i32>} : memref<1x8x32xf32, #tpu.memory_space<vmem>>, vector<1x8x32xf32>,
      %cst_58 = arith.constant 0.000000e+00 : f32
      %238 = vector.broadcast %cst_58 : f32 to vector<8x32xf32>
      %c0_59 = arith.constant 0 : index
      %c0_60 = arith.constant 0 : index
      %239 = vector.load %arg9[%c0_59, %c0_60] : memref<8x32xf32, #tpu.memory_space<vmem>>, vector<8x32xf32>
      tpu.vector_store %arg9[%c0_59, %c0_60], %238 {strides = array<i32>} : memref<8x32xf32, #tpu.memory_space<vmem>>, vector<8x32xf32>,
    } else {
    }
    %c0 = arith.constant 0 : index
    %c0_1 = arith.constant 0 : index
    %c0_2 = arith.constant 0 : index
    %3 = vector.load %arg2[%c0, %c0_1, %c0_2] : memref<1x64x16xf32, #tpu.memory_space<vmem>>, vector<1x64x16xf32>
    %4 = vector.shape_cast %3 : vector<1x64x16xf32> to vector<64x16xf32>
    %c0_3 = arith.constant 0 : index
    %c0_4 = arith.constant 0 : index
    %5 = vector.load %arg4[%c0_3, %c0_4] : memref<16x128xf32, #tpu.memory_space<vmem>>, vector<16x128xf32>
    %cst = arith.constant dense<0.000000e+00> : vector<64x128xf32>
    %6 = tpu.matmul %4, %5, %cst {dimension_numbers = #tpu.dot_dimension_numbers<[1], [0], [0], [1], [0, 0, 1, 1], [], []>} : vector<64x16xf32>, vector<16x128xf32>, vector<64x128xf32> -> vector<64x128xf32>
    %c0_5 = arith.constant 0 : index
    %c0_6 = arith.constant 0 : index
    %7 = vector.load %arg6[%c0_5, %c0_6] : memref<1x128xf32, #tpu.memory_space<vmem>>, vector<1x128xf32>
    %8 = vector.broadcast %7 : vector<1x128xf32> to vector<64x128xf32>
    %9 = arith.addf %6, %8 : vector<64x128xf32>
    %c0_7 = arith.constant 0 : index
    %c0_8 = arith.constant 0 : index
    %10 = vector.load %arg8[%c0_7, %c0_8] : memref<64x128xf32, #tpu.memory_space<vmem>>, vector<64x128xf32>
    tpu.vector_store %arg8[%c0_7, %c0_8], %9 {strides = array<i32>} : memref<64x128xf32, #tpu.memory_space<vmem>>, vector<64x128xf32>,
    %c0_9 = arith.constant 0 : index
    %c0_10 = arith.constant 0 : index
    %11 = vector.load %arg5[%c0_9, %c0_10] : memref<32x128xf32, #tpu.memory_space<vmem>>, vector<32x128xf32>
    %c0_11 = arith.constant 0 : index
    %c0_12 = arith.constant 0 : index
    %c0_13 = arith.constant 0 : index
    %12 = vector.load %arg3[%c0_11, %c0_12, %c0_13] : memref<1x8x1xi32, #tpu.memory_space<vmem>>, vector<1x8x1xi32>
    %13 = vector.shape_cast %12 : vector<1x8x1xi32> to vector<8x1xi32>
    %14 = tpu.iota {dimensions = array<i32: 1>} : vector<8x128xi32>
    %c64_i32 = arith.constant 64 : i32
    %15 = vector.broadcast %c64_i32 : i32 to vector<8x128xi32>
    %16 = arith.cmpi sge, %14, %15 : vector<8x128xi32>
    %c96_i32 = arith.constant 96 : i32
    %17 = vector.broadcast %c96_i32 : i32 to vector<8x128xi32>
    %18 = arith.cmpi slt, %14, %17 : vector<8x128xi32>
    %19 = arith.andi %16, %18 : vector<8x128xi1>
    %cst_14 = arith.constant 1.000000e+00 : f32
    %cst_15 = arith.constant 5.000000e-01 : f32
    %20 = vector.broadcast %cst_14 : f32 to vector<8x128xf32>
    %21 = vector.broadcast %cst_15 : f32 to vector<8x128xf32>
    %22 = arith.select %19, %20, %21 : vector<8x128xi1>, vector<8x128xf32>
    %cst_16 = arith.constant 0.000000e+00 : f32
    %cst_17 = arith.constant 5.000000e-01 : f32
    %23 = vector.broadcast %cst_16 : f32 to vector<8x128xf32>
    %24 = vector.broadcast %cst_17 : f32 to vector<8x128xf32>
    %25 = arith.select %19, %23, %24 : vector<8x128xi1>, vector<8x128xf32>
    %c8_i32 = arith.constant 8 : i32
    %26 = arith.muli %arg1, %c8_i32 : i32
    %c0_18 = arith.constant 0 : index
    %c0_19 = arith.constant 0 : index
    %c0_20 = arith.constant 0 : index
    %27 = vector.load %arg7[%c0_18, %c0_19, %c0_20] : memref<1x8x32xf32, #tpu.memory_space<vmem>>, vector<1x8x32xf32>
    %28 = vector.shape_cast %27 : vector<1x8x32xf32> to vector<8x32xf32>
    %c0_21 = arith.constant 0 : index
    %c0_22 = arith.constant 0 : index
    %29 = vector.load %arg9[%c0_21, %c0_22] : memref<8x32xf32, #tpu.memory_space<vmem>>, vector<8x32xf32>
    %c0_i32_23 = arith.constant 0 : i32
    %c8_i32_24 = arith.constant 8 : i32
    %30 = arith.muli %c0_i32_23, %c8_i32_24 : i32
    %31 = tpu.assume_multiple %30, 8 : i32
    %32 = arith.index_cast %31 : i32 to index
    %c0_25 = arith.constant 0 : index
    %33 = vector.load %arg8[%32, %c0_25] : memref<64x128xf32, #tpu.memory_space<vmem>>, vector<8x128xf32>
    %cst_26 = arith.constant dense<0.000000e+00> : vector<8x128xf32>
    %34 = tpu.matmul %28, %11, %cst_26 {dimension_numbers = #tpu.dot_dimension_numbers<[1], [0], [0], [1], [0, 0, 1, 1], [], []>} : vector<8x32xf32>, vector<32x128xf32>, vector<8x128xf32> -> vector<8x128xf32>
    %35 = arith.addf %33, %34 : vector<8x128xf32>
    %36 = arith.mulf %35, %22 : vector<8x128xf32>
    %37 = math.tanh %36 : vector<8x128xf32>
    %38 = arith.mulf %37, %22 : vector<8x128xf32>
    %39 = arith.addf %38, %25 : vector<8x128xf32>
    %40 = vector.extract_strided_slice %39 {offsets = [0, 0], sizes = [8, 32], strides = [1, 1]} : vector<8x128xf32> to vector<8x32xf32>
    %41 = vector.extract_strided_slice %39 {offsets = [0, 32], sizes = [8, 32], strides = [1, 1]} : vector<8x128xf32> to vector<8x32xf32>
    %42 = vector.extract_strided_slice %39 {offsets = [0, 64], sizes = [8, 32], strides = [1, 1]} : vector<8x128xf32> to vector<8x32xf32>
    %43 = vector.extract_strided_slice %39 {offsets = [0, 96], sizes = [8, 32], strides = [1, 1]} : vector<8x128xf32> to vector<8x32xf32>
    %44 = arith.mulf %41, %29 : vector<8x32xf32>
    %45 = arith.mulf %40, %42 : vector<8x32xf32>
    %46 = arith.addf %44, %45 : vector<8x32xf32>
    %47 = math.tanh %46 : vector<8x32xf32>
    %48 = arith.mulf %43, %47 : vector<8x32xf32>
    %49 = arith.addi %26, %c0_i32_23 : i32
    %50 = vector.broadcast %49 : i32 to vector<8x1xi32>
    %51 = arith.cmpi slt, %50, %13 : vector<8x1xi32>
    %52 = vector.shape_cast %51 : vector<8x1xi1> to vector<8x1xi1>
    %53 = vector.broadcast %52 : vector<8x1xi1> to vector<8x32xi1>
    %54 = arith.select %53, %48, %28 : vector<8x32xi1>, vector<8x32xf32>
    %c1_i32 = arith.constant 1 : i32
    %c8_i32_27 = arith.constant 8 : i32
    %55 = arith.muli %c1_i32, %c8_i32_27 : i32
    %56 = tpu.assume_multiple %55, 8 : i32
    %57 = arith.index_cast %56 : i32 to index
    %c0_28 = arith.constant 0 : index
    %58 = vector.load %arg8[%57, %c0_28] : memref<64x128xf32, #tpu.memory_space<vmem>>, vector<8x128xf32>
    %cst_29 = arith.constant dense<0.000000e+00> : vector<8x128xf32>
    %59 = tpu.matmul %54, %11, %cst_29 {dimension_numbers = #tpu.dot_dimension_numbers<[1], [0], [0], [1], [0, 0, 1, 1], [], []>} : vector<8x32xf32>, vector<32x128xf32>, vector<8x128xf32> -> vector<8x128xf32>
    %60 = arith.addf %58, %59 : vector<8x128xf32>
    %61 = arith.mulf %60, %22 : vector<8x128xf32>
    %62 = math.tanh %61 : vector<8x128xf32>
    %63 = arith.mulf %62, %22 : vector<8x128xf32>
    %64 = arith.addf %63, %25 : vector<8x128xf32>
    %65 = vector.extract_strided_slice %64 {offsets = [0, 0], sizes = [8, 32], strides = [1, 1]} : vector<8x128xf32> to vector<8x32xf32>
    %66 = vector.extract_strided_slice %64 {offsets = [0, 32], sizes = [8, 32], strides = [1, 1]} : vector<8x128xf32> to vector<8x32xf32>
    %67 = vector.extract_strided_slice %64 {offsets = [0, 64], sizes = [8, 32], strides = [1, 1]} : vector<8x128xf32> to vector<8x32xf32>
    %68 = vector.extract_strided_slice %64 {offsets = [0, 96], sizes = [8, 32], strides = [1, 1]} : vector<8x128xf32> to vector<8x32xf32>
    %69 = arith.mulf %66, %46 : vector<8x32xf32>
    %70 = arith.mulf %65, %67 : vector<8x32xf32>
    %71 = arith.addf %69, %70 : vector<8x32xf32>
    %72 = math.tanh %71 : vector<8x32xf32>
    %73 = arith.mulf %68, %72 : vector<8x32xf32>
    %74 = arith.addi %26, %c1_i32 : i32
    %75 = vector.broadcast %74 : i32 to vector<8x1xi32>
    %76 = arith.cmpi slt, %75, %13 : vector<8x1xi32>
    %77 = vector.shape_cast %76 : vector<8x1xi1> to vector<8x1xi1>
    %78 = vector.broadcast %77 : vector<8x1xi1> to vector<8x32xi1>
    %79 = arith.select %78, %73, %54 : vector<8x32xi1>, vector<8x32xf32>
    %c2_i32 = arith.constant 2 : i32
    %c8_i32_30 = arith.constant 8 : i32
    %80 = arith.muli %c2_i32, %c8_i32_30 : i32
    %81 = tpu.assume_multiple %80, 8 : i32
    %82 = arith.index_cast %81 : i32 to index
    %c0_31 = arith.constant 0 : index
    %83 = vector.load %arg8[%82, %c0_31] : memref<64x128xf32, #tpu.memory_space<vmem>>, vector<8x128xf32>
    %cst_32 = arith.constant dense<0.000000e+00> : vector<8x128xf32>
    %84 = tpu.matmul %79, %11, %cst_32 {dimension_numbers = #tpu.dot_dimension_numbers<[1], [0], [0], [1], [0, 0, 1, 1], [], []>} : vector<8x32xf32>, vector<32x128xf32>, vector<8x128xf32> -> vector<8x128xf32>
    %85 = arith.addf %83, %84 : vector<8x128xf32>
    %86 = arith.mulf %85, %22 : vector<8x128xf32>
    %87 = math.tanh %86 : vector<8x128xf32>
    %88 = arith.mulf %87, %22 : vector<8x128xf32>
    %89 = arith.addf %88, %25 : vector<8x128xf32>
    %90 = vector.extract_strided_slice %89 {offsets = [0, 0], sizes = [8, 32], strides = [1, 1]} : vector<8x128xf32> to vector<8x32xf32>
    %91 = vector.extract_strided_slice %89 {offsets = [0, 32], sizes = [8, 32], strides = [1, 1]} : vector<8x128xf32> to vector<8x32xf32>
    %92 = vector.extract_strided_slice %89 {offsets = [0, 64], sizes = [8, 32], strides = [1, 1]} : vector<8x128xf32> to vector<8x32xf32>
    %93 = vector.extract_strided_slice %89 {offsets = [0, 96], sizes = [8, 32], strides = [1, 1]} : vector<8x128xf32> to vector<8x32xf32>
    %94 = arith.mulf %91, %71 : vector<8x32xf32>
    %95 = arith.mulf %90, %92 : vector<8x32xf32>
    %96 = arith.addf %94, %95 : vector<8x32xf32>
    %97 = math.tanh %96 : vector<8x32xf32>
    %98 = arith.mulf %93, %97 : vector<8x32xf32>
    %99 = arith.addi %26, %c2_i32 : i32
    %100 = vector.broadcast %99 : i32 to vector<8x1xi32>
    %101 = arith.cmpi slt, %100, %13 : vector<8x1xi32>
    %102 = vector.shape_cast %101 : vector<8x1xi1> to vector<8x1xi1>
    %103 = vector.broadcast %102 : vector<8x1xi1> to vector<8x32xi1>
    %104 = arith.select %103, %98, %79 : vector<8x32xi1>, vector<8x32xf32>
    %c3_i32 = arith.constant 3 : i32
    %c8_i32_33 = arith.constant 8 : i32
    %105 = arith.muli %c3_i32, %c8_i32_33 : i32
    %106 = tpu.assume_multiple %105, 8 : i32
    %107 = arith.index_cast %106 : i32 to index
    %c0_34 = arith.constant 0 : index
    %108 = vector.load %arg8[%107, %c0_34] : memref<64x128xf32, #tpu.memory_space<vmem>>, vector<8x128xf32>
    %cst_35 = arith.constant dense<0.000000e+00> : vector<8x128xf32>
    %109 = tpu.matmul %104, %11, %cst_35 {dimension_numbers = #tpu.dot_dimension_numbers<[1], [0], [0], [1], [0, 0, 1, 1], [], []>} : vector<8x32xf32>, vector<32x128xf32>, vector<8x128xf32> -> vector<8x128xf32>
    %110 = arith.addf %108, %109 : vector<8x128xf32>
    %111 = arith.mulf %110, %22 : vector<8x128xf32>
    %112 = math.tanh %111 : vector<8x128xf32>
    %113 = arith.mulf %112, %22 : vector<8x128xf32>
    %114 = arith.addf %113, %25 : vector<8x128xf32>
    %115 = vector.extract_strided_slice %114 {offsets = [0, 0], sizes = [8, 32], strides = [1, 1]} : vector<8x128xf32> to vector<8x32xf32>
    %116 = vector.extract_strided_slice %114 {offsets = [0, 32], sizes = [8, 32], strides = [1, 1]} : vector<8x128xf32> to vector<8x32xf32>
    %117 = vector.extract_strided_slice %114 {offsets = [0, 64], sizes = [8, 32], strides = [1, 1]} : vector<8x128xf32> to vector<8x32xf32>
    %118 = vector.extract_strided_slice %114 {offsets = [0, 96], sizes = [8, 32], strides = [1, 1]} : vector<8x128xf32> to vector<8x32xf32>
    %119 = arith.mulf %116, %96 : vector<8x32xf32>
    %120 = arith.mulf %115, %117 : vector<8x32xf32>
    %121 = arith.addf %119, %120 : vector<8x32xf32>
    %122 = math.tanh %121 : vector<8x32xf32>
    %123 = arith.mulf %118, %122 : vector<8x32xf32>
    %124 = arith.addi %26, %c3_i32 : i32
    %125 = vector.broadcast %124 : i32 to vector<8x1xi32>
    %126 = arith.cmpi slt, %125, %13 : vector<8x1xi32>
    %127 = vector.shape_cast %126 : vector<8x1xi1> to vector<8x1xi1>
    %128 = vector.broadcast %127 : vector<8x1xi1> to vector<8x32xi1>
    %129 = arith.select %128, %123, %104 : vector<8x32xi1>, vector<8x32xf32>
    %c4_i32 = arith.constant 4 : i32
    %c8_i32_36 = arith.constant 8 : i32
    %130 = arith.muli %c4_i32, %c8_i32_36 : i32
    %131 = tpu.assume_multiple %130, 8 : i32
    %132 = arith.index_cast %131 : i32 to index
    %c0_37 = arith.constant 0 : index
    %133 = vector.load %arg8[%132, %c0_37] : memref<64x128xf32, #tpu.memory_space<vmem>>, vector<8x128xf32>
    %cst_38 = arith.constant dense<0.000000e+00> : vector<8x128xf32>
    %134 = tpu.matmul %129, %11, %cst_38 {dimension_numbers = #tpu.dot_dimension_numbers<[1], [0], [0], [1], [0, 0, 1, 1], [], []>} : vector<8x32xf32>, vector<32x128xf32>, vector<8x128xf32> -> vector<8x128xf32>
    %135 = arith.addf %133, %134 : vector<8x128xf32>
    %136 = arith.mulf %135, %22 : vector<8x128xf32>
    %137 = math.tanh %136 : vector<8x128xf32>
    %138 = arith.mulf %137, %22 : vector<8x128xf32>
    %139 = arith.addf %138, %25 : vector<8x128xf32>
    %140 = vector.extract_strided_slice %139 {offsets = [0, 0], sizes = [8, 32], strides = [1, 1]} : vector<8x128xf32> to vector<8x32xf32>
    %141 = vector.extract_strided_slice %139 {offsets = [0, 32], sizes = [8, 32], strides = [1, 1]} : vector<8x128xf32> to vector<8x32xf32>
    %142 = vector.extract_strided_slice %139 {offsets = [0, 64], sizes = [8, 32], strides = [1, 1]} : vector<8x128xf32> to vector<8x32xf32>
    %143 = vector.extract_strided_slice %139 {offsets = [0, 96], sizes = [8, 32], strides = [1, 1]} : vector<8x128xf32> to vector<8x32xf32>
    %144 = arith.mulf %141, %121 : vector<8x32xf32>
    %145 = arith.mulf %140, %142 : vector<8x32xf32>
    %146 = arith.addf %144, %145 : vector<8x32xf32>
    %147 = math.tanh %146 : vector<8x32xf32>
    %148 = arith.mulf %143, %147 : vector<8x32xf32>
    %149 = arith.addi %26, %c4_i32 : i32
    %150 = vector.broadcast %149 : i32 to vector<8x1xi32>
    %151 = arith.cmpi slt, %150, %13 : vector<8x1xi32>
    %152 = vector.shape_cast %151 : vector<8x1xi1> to vector<8x1xi1>
    %153 = vector.broadcast %152 : vector<8x1xi1> to vector<8x32xi1>
    %154 = arith.select %153, %148, %129 : vector<8x32xi1>, vector<8x32xf32>
    %c5_i32 = arith.constant 5 : i32
    %c8_i32_39 = arith.constant 8 : i32
    %155 = arith.muli %c5_i32, %c8_i32_39 : i32
    %156 = tpu.assume_multiple %155, 8 : i32
    %157 = arith.index_cast %156 : i32 to index
    %c0_40 = arith.constant 0 : index
    %158 = vector.load %arg8[%157, %c0_40] : memref<64x128xf32, #tpu.memory_space<vmem>>, vector<8x128xf32>
    %cst_41 = arith.constant dense<0.000000e+00> : vector<8x128xf32>
    %159 = tpu.matmul %154, %11, %cst_41 {dimension_numbers = #tpu.dot_dimension_numbers<[1], [0], [0], [1], [0, 0, 1, 1], [], []>} : vector<8x32xf32>, vector<32x128xf32>, vector<8x128xf32> -> vector<8x128xf32>
    %160 = arith.addf %158, %159 : vector<8x128xf32>
    %161 = arith.mulf %160, %22 : vector<8x128xf32>
    %162 = math.tanh %161 : vector<8x128xf32>
    %163 = arith.mulf %162, %22 : vector<8x128xf32>
    %164 = arith.addf %163, %25 : vector<8x128xf32>
    %165 = vector.extract_strided_slice %164 {offsets = [0, 0], sizes = [8, 32], strides = [1, 1]} : vector<8x128xf32> to vector<8x32xf32>
    %166 = vector.extract_strided_slice %164 {offsets = [0, 32], sizes = [8, 32], strides = [1, 1]} : vector<8x128xf32> to vector<8x32xf32>
    %167 = vector.extract_strided_slice %164 {offsets = [0, 64], sizes = [8, 32], strides = [1, 1]} : vector<8x128xf32> to vector<8x32xf32>
    %168 = vector.extract_strided_slice %164 {offsets = [0, 96], sizes = [8, 32], strides = [1, 1]} : vector<8x128xf32> to vector<8x32xf32>
    %169 = arith.mulf %166, %146 : vector<8x32xf32>
    %170 = arith.mulf %165, %167 : vector<8x32xf32>
    %171 = arith.addf %169, %170 : vector<8x32xf32>
    %172 = math.tanh %171 : vector<8x32xf32>
    %173 = arith.mulf %168, %172 : vector<8x32xf32>
    %174 = arith.addi %26, %c5_i32 : i32
    %175 = vector.broadcast %174 : i32 to vector<8x1xi32>
    %176 = arith.cmpi slt, %175, %13 : vector<8x1xi32>
    %177 = vector.shape_cast %176 : vector<8x1xi1> to vector<8x1xi1>
    %178 = vector.broadcast %177 : vector<8x1xi1> to vector<8x32xi1>
    %179 = arith.select %178, %173, %154 : vector<8x32xi1>, vector<8x32xf32>
    %c6_i32 = arith.constant 6 : i32
    %c8_i32_42 = arith.constant 8 : i32
    %180 = arith.muli %c6_i32, %c8_i32_42 : i32
    %181 = tpu.assume_multiple %180, 8 : i32
    %182 = arith.index_cast %181 : i32 to index
    %c0_43 = arith.constant 0 : index
    %183 = vector.load %arg8[%182, %c0_43] : memref<64x128xf32, #tpu.memory_space<vmem>>, vector<8x128xf32>
    %cst_44 = arith.constant dense<0.000000e+00> : vector<8x128xf32>
    %184 = tpu.matmul %179, %11, %cst_44 {dimension_numbers = #tpu.dot_dimension_numbers<[1], [0], [0], [1], [0, 0, 1, 1], [], []>} : vector<8x32xf32>, vector<32x128xf32>, vector<8x128xf32> -> vector<8x128xf32>
    %185 = arith.addf %183, %184 : vector<8x128xf32>
    %186 = arith.mulf %185, %22 : vector<8x128xf32>
    %187 = math.tanh %186 : vector<8x128xf32>
    %188 = arith.mulf %187, %22 : vector<8x128xf32>
    %189 = arith.addf %188, %25 : vector<8x128xf32>
    %190 = vector.extract_strided_slice %189 {offsets = [0, 0], sizes = [8, 32], strides = [1, 1]} : vector<8x128xf32> to vector<8x32xf32>
    %191 = vector.extract_strided_slice %189 {offsets = [0, 32], sizes = [8, 32], strides = [1, 1]} : vector<8x128xf32> to vector<8x32xf32>
    %192 = vector.extract_strided_slice %189 {offsets = [0, 64], sizes = [8, 32], strides = [1, 1]} : vector<8x128xf32> to vector<8x32xf32>
    %193 = vector.extract_strided_slice %189 {offsets = [0, 96], sizes = [8, 32], strides = [1, 1]} : vector<8x128xf32> to vector<8x32xf32>
    %194 = arith.mulf %191, %171 : vector<8x32xf32>
    %195 = arith.mulf %190, %192 : vector<8x32xf32>
    %196 = arith.addf %194, %195 : vector<8x32xf32>
    %197 = math.tanh %196 : vector<8x32xf32>
    %198 = arith.mulf %193, %197 : vector<8x32xf32>
    %199 = arith.addi %26, %c6_i32 : i32
    %200 = vector.broadcast %199 : i32 to vector<8x1xi32>
    %201 = arith.cmpi slt, %200, %13 : vector<8x1xi32>
    %202 = vector.shape_cast %201 : vector<8x1xi1> to vector<8x1xi1>
    %203 = vector.broadcast %202 : vector<8x1xi1> to vector<8x32xi1>
    %204 = arith.select %203, %198, %179 : vector<8x32xi1>, vector<8x32xf32>
    %c7_i32 = arith.constant 7 : i32
    %c8_i32_45 = arith.constant 8 : i32
    %205 = arith.muli %c7_i32, %c8_i32_45 : i32
    %206 = tpu.assume_multiple %205, 8 : i32
    %207 = arith.index_cast %206 : i32 to index
    %c0_46 = arith.constant 0 : index
    %208 = vector.load %arg8[%207, %c0_46] : memref<64x128xf32, #tpu.memory_space<vmem>>, vector<8x128xf32>
    %cst_47 = arith.constant dense<0.000000e+00> : vector<8x128xf32>
    %209 = tpu.matmul %204, %11, %cst_47 {dimension_numbers = #tpu.dot_dimension_numbers<[1], [0], [0], [1], [0, 0, 1, 1], [], []>} : vector<8x32xf32>, vector<32x128xf32>, vector<8x128xf32> -> vector<8x128xf32>
    %210 = arith.addf %208, %209 : vector<8x128xf32>
    %211 = arith.mulf %210, %22 : vector<8x128xf32>
    %212 = math.tanh %211 : vector<8x128xf32>
    %213 = arith.mulf %212, %22 : vector<8x128xf32>
    %214 = arith.addf %213, %25 : vector<8x128xf32>
    %215 = vector.extract_strided_slice %214 {offsets = [0, 0], sizes = [8, 32], strides = [1, 1]} : vector<8x128xf32> to vector<8x32xf32>
    %216 = vector.extract_strided_slice %214 {offsets = [0, 32], sizes = [8, 32], strides = [1, 1]} : vector<8x128xf32> to vector<8x32xf32>
    %217 = vector.extract_strided_slice %214 {offsets = [0, 64], sizes = [8, 32], strides = [1, 1]} : vector<8x128xf32> to vector<8x32xf32>
    %218 = vector.extract_strided_slice %214 {offsets = [0, 96], sizes = [8, 32], strides = [1, 1]} : vector<8x128xf32> to vector<8x32xf32>
    %219 = arith.mulf %216, %196 : vector<8x32xf32>
    %220 = arith.mulf %215, %217 : vector<8x32xf32>
    %221 = arith.addf %219, %220 : vector<8x32xf32>
    %222 = math.tanh %221 : vector<8x32xf32>
    %223 = arith.mulf %218, %222 : vector<8x32xf32>
    %224 = arith.addi %26, %c7_i32 : i32
    %225 = vector.broadcast %224 : i32 to vector<8x1xi32>
    %226 = arith.cmpi slt, %225, %13 : vector<8x1xi32>
    %227 = vector.shape_cast %226 : vector<8x1xi1> to vector<8x1xi1>
    %228 = vector.broadcast %227 : vector<8x1xi1> to vector<8x32xi1>
    %229 = arith.select %228, %223, %204 : vector<8x32xi1>, vector<8x32xf32>
    %c8_i32_48 = arith.constant 8 : i32
    %c0_49 = arith.constant 0 : index
    %c0_50 = arith.constant 0 : index
    %c0_51 = arith.constant 0 : index
    %230 = vector.load %arg7[%c0_49, %c0_50, %c0_51] : memref<1x8x32xf32, #tpu.memory_space<vmem>>, vector<1x8x32xf32>
    %231 = vector.shape_cast %230 : vector<1x8x32xf32> to vector<8x32xf32>
    %232 = vector.shape_cast %229 : vector<8x32xf32> to vector<1x8x32xf32>
    tpu.vector_store %arg7[%c0_49, %c0_50, %c0_51], %232 {strides = array<i32>} : memref<1x8x32xf32, #tpu.memory_space<vmem>>, vector<1x8x32xf32>,
    %c0_52 = arith.constant 0 : index
    %c0_53 = arith.constant 0 : index
    %233 = vector.load %arg9[%c0_52, %c0_53] : memref<8x32xf32, #tpu.memory_space<vmem>>, vector<8x32xf32>
    tpu.vector_store %arg9[%c0_52, %c0_53], %221 {strides = array<i32>} : memref<8x32xf32, #tpu.memory_space<vmem>>, vector<8x32xf32>,
    return
  }
  func.func @transform_0(%arg0: i32, %arg1: i32) -> (i32, i32, i32) {
    %c0_i32 = arith.constant 0 : i32
    %c0_i32_0 = arith.constant 0 : i32
    return %arg0, %arg1, %c0_i32 : i32, i32, i32
  }
  func.func @transform_1(%arg0: i32, %arg1: i32) -> (i32, i32, i32) {
    %c0_i32 = arith.constant 0 : i32
    %c0_i32_0 = arith.constant 0 : i32
    %c0_i32_1 = arith.constant 0 : i32
    return %arg0, %c0_i32, %c0_i32_0 : i32, i32, i32
  }
  func.func @transform_2(%arg0: i32, %arg1: i32) -> (i32, i32) {
    %c0_i32 = arith.constant 0 : i32
    %c0_i32_0 = arith.constant 0 : i32
    %c0_i32_1 = arith.constant 0 : i32
    return %c0_i32, %c0_i32_0 : i32, i32
  }
  func.func @transform_3(%arg0: i32, %arg1: i32) -> (i32, i32) {
    %c0_i32 = arith.constant 0 : i32
    %c0_i32_0 = arith.constant 0 : i32
    %c0_i32_1 = arith.constant 0 : i32
    return %c0_i32, %c0_i32_0 : i32, i32
  }
  func.func @transform_4(%arg0: i32, %arg1: i32) -> (i32, i32) {
    %c0_i32 = arith.constant 0 : i32
    %c0_i32_0 = arith.constant 0 : i32
    %c0_i32_1 = arith.constant 0 : i32
    return %c0_i32, %c0_i32_0 : i32, i32
  }
  func.func @transform_5(%arg0: i32, %arg1: i32) -> (i32, i32, i32) {
    %c0_i32 = arith.constant 0 : i32
    %c0_i32_0 = arith.constant 0 : i32
    %c0_i32_1 = arith.constant 0 : i32
    return %arg0, %c0_i32, %c0_i32_0 : i32, i32, i32
  }
}

</mosaic_0001>

<llo_original>
// kernel: tpu_custom_call.1
$region0: #{tpu_custom_call.1}
  #allocation0 [shape = 'u32[]', space=smem, size = 0x4, offset = 0x4, fixed_abs, tag = 'smem constant byte address 0x4 - core index']
  #allocation1 [shape = 'u32[144,128]{1,0:T(1,128)}', space=vmem, size = 0x12000, scoped, tag = 'internal scratch']
  #allocation2 [shape = 'f32[64,128]{1,0:T(8,128)}', space=vmem, size = 0x8000, scoped, tag = 'scratch operand']
  #allocation3 [shape = 'f32[8,32]{1,0:T(8,128)}', space=vmem, size = 0x1000, scoped, tag = 'scratch operand']
  %s0 = inlined_call_operand.vmem [shape: f32[1,64,16], index: 0, kind: input, shape index: {}]
  %s1 = inlined_call_operand.vmem [shape: s32[1,8,1], index: 1, kind: input, shape index: {}]
  %s2 = inlined_call_operand.vmem [shape: f32[16,128], index: 2, kind: input, shape index: {}]
  %s3 = inlined_call_operand.vmem [shape: f32[32,128], index: 3, kind: input, shape index: {}]
  %s4 = inlined_call_operand.vmem [shape: f32[1,128], index: 4, kind: input, shape index: {}]
  %s5 = inlined_call_operand.hbm [shape: f32[1,8,32], index: 5, kind: output, shape index: {}]
  %s6 = sld [smem:[#allocation0]]
  $region34: #{tpu_custom_call.1} parent=0
    _
  %s8 = ssub.s32 1, %s6
  %s9 = scalar_select 0, %s8, %s6
  $region1: #{tpu_custom_call.1} parent=0
    #allocation4 [shape = 'u8[4096]{0}', space=vmem, size = 0x1000, scoped, tag = 'output window, operand 0, single buffered']
    #allocation5 [shape = 's32[1]{0}', space=sflag, size = 0x4, scoped, tag = 'scoped memory for tpu_custom_call.1']
    %10 = vsyncpa [#allocation5], 0
    // Predicated region
    $region2: #{tpu_custom_call.1} parent=1 // pred_check
      _
    $region3: #{tpu_custom_call.1} parent=1 // pred_check_branch
      %12 = sbr.rel (0) target = $region5
    $region4: #{tpu_custom_call.1} parent=1 // pred_region
      _
    $region5: #{tpu_custom_call.1} parent=1 // pred_fallthru
      _
    // Predicated region
    $region6: #{tpu_custom_call.1} parent=1 // pred_check
      _
    $region7: #{tpu_custom_call.1} parent=1 // pred_check_branch
      %14 = sbr.rel (0) target = $region9
    $region8: #{tpu_custom_call.1} parent=1 // pred_region
      _
    $region9: #{tpu_custom_call.1} parent=1 // pred_fallthru
      _
    // Predicated region
    $region10: #{tpu_custom_call.1} parent=1 // pred_check
      _
    $region11: #{tpu_custom_call.1} parent=1 // pred_check_branch
      %16 = sbr.rel (0) target = $region13
    $region12: #{tpu_custom_call.1} parent=1 // pred_region
      _
    $region13: #{tpu_custom_call.1} parent=1 // pred_fallthru
      _
    // Predicated region
    $region14: #{tpu_custom_call.1} parent=1 // pred_check
      _
    $region15: #{tpu_custom_call.1} parent=1 // pred_check_branch
      %18 = sbr.rel (0) target = $region17
    $region16: #{tpu_custom_call.1} parent=1 // pred_region
      _
    $region17: #{tpu_custom_call.1} parent=1 // pred_fallthru
      _
    // Predicated region
    $region18: #{tpu_custom_call.1} parent=1 // pred_check
      _
    $region19: #{tpu_custom_call.1} parent=1 // pred_check_branch
      %20 = sbr.rel (0) target = $region21
    $region20: #{tpu_custom_call.1} parent=1 // pred_region
      _
    $region21: #{tpu_custom_call.1} parent=1 // pred_fallthru
      _
    %p21 = scmp.eq.s32.totalorder 0, 0
    // Predicated region
    $region22: #{tpu_custom_call.1} parent=1 // pred_check
      %p22 = pneg %p21
    $region23: #{tpu_custom_call.1} parent=1 // pred_check_branch
      %24 = sbr.rel (%p22) target = $region25
    $region24: #{tpu_custom_call.1} parent=1 // pred_region
      %vm25 = vcmask 261120
      %26 = vst.msk [vmem:[#allocation4] sm:$0xff] %vm25, 0.0
      %27 = vst.msk [vmem:[#allocation3] sm:$0xff] %vm25, 0.0
    $region25: #{tpu_custom_call.1} parent=1 // pred_fallthru
      _
    %v28 = vld [vmem:[%s0] sm:$0xff]
    %v29 = vld [vmem:[%s0 + $0x8] sm:$0xff]
    %v30 = vld [vmem:[%s0 + $0x10] sm:$0xff]
    %v31 = vld [vmem:[%s0 + $0x18] sm:$0xff]
    %v32 = vld [vmem:[%s0 + $0x20] sm:$0xff]
    %v33 = vld [vmem:[%s0 + $0x28] sm:$0xff]
    %v34 = vld [vmem:[%s0 + $0x30] sm:$0xff]
    %v35 = vld [vmem:[%s0 + $0x38] sm:$0xff]
    %v36 = vld [vmem:[%s2] sm:$0xff]
    %v37 = vld [vmem:[%s2 + $0x8] sm:$0xff]
    %v38 = vld [vmem:[%s4] sm:$0x1]
    %v40 = vlaneseq
    %v41 = vshrl.u32 %v40, 7
    %v42 = vsub.s32 0, %v41
    %v43 = vrot.slane %v38, %v42
    %vm45 = vcmask 130048
    %v47 = vsel %vm45, %v28, 0
    %v50 = vsel %vm45, %v29, 0
    %v53 = vsel %vm45, %v30, 0
    %v56 = vsel %vm45, %v31, 0
    %v59 = vsel %vm45, %v32, 0
    %v62 = vsel %vm45, %v33, 0
    %v65 = vsel %vm45, %v34, 0
    %v68 = vsel %vm45, %v35, 0
    %70 = vmatprep.subr.mxu0 0.0
    %71 = vmatpush1.msra.mxu0 %v36
    %72 = vmatprep.subr.mxu0 0.0
    %73 = vmatpush1.msra.mxu0 %v37
    %74 = vmatprep.subr.mxu0 0.0
    %75 = vmatpush1.msra.mxu0 0.0
    %76 = vmatprep.subr.mxu0 0.0
    %77 = vmatpush1.msra.mxu0 0.0
    %78 = vmatprep.subr.mxu0 0.0
    %79 = vmatpush1.msra.mxu0 0.0
    %80 = vmatprep.subr.mxu0 0.0
    %81 = vmatpush1.msra.mxu0 0.0
    %82 = vmatprep.subr.mxu0 0.0
    %83 = vmatpush1.msra.mxu0 0.0
    %84 = vmatprep.subr.mxu0 0.0
    %85 = vmatpush1.msra.mxu0 0.0
    %86 = vmatprep.subr.mxu0 0.0
    %87 = vmatpush1.msra.mxu0 0.0
    %88 = vmatprep.subr.mxu0 0.0
    %89 = vmatpush1.msra.mxu0 0.0
    %90 = vmatprep.subr.mxu0 0.0
    %91 = vmatpush1.msra.mxu0 0.0
    %92 = vmatprep.subr.mxu0 0.0
    %93 = vmatpush1.msra.mxu0 0.0
    %94 = vmatprep.subr.mxu0 0.0
    %95 = vmatpush1.msra.mxu0 0.0
    %96 = vmatprep.subr.mxu0 0.0
    %97 = vmatpush1.msra.mxu0 0.0
    %98 = vmatprep.subr.mxu0 0.0
    %99 = vmatpush1.msra.mxu0 0.0
    %100 = vmatprep.subr.mxu0 0.0
    %101 = vmatpush1.msra.mxu0 0.0
    %102 = vmatprep.subr.mxu0 0.0
    %103 = vmatpush1.msra.mxu0 0.0
    %104 = vmatprep.subr.mxu0 0.0
    %105 = vmatpush1.msra.mxu0 0.0
    %106 = vmatprep.subr.mxu0 0.0
    %107 = vmatpush1.msra.mxu0 0.0
    %108 = vmatprep.subr.mxu0 0.0
    %109 = vmatpush1.msra.mxu0 0.0
    %110 = vmatprep.subr.mxu0 0.0
    %111 = vmatpush1.msra.mxu0 0.0
    %112 = vmatprep.subr.mxu0 0.0
    %113 = vmatpush1.msra.mxu0 0.0
    %114 = vmatprep.subr.mxu0 0.0
    %115 = vmatpush1.msra.mxu0 0.0
    %116 = vmatprep.subr.mxu0 0.0
    %117 = vmatpush1.msra.mxu0 0.0
    %118 = vmatprep.subr.mxu0 0.0
    %119 = vmatpush1.msra.mxu0 0.0
    %120 = vmatprep.subr.mxu0 0.0
    %121 = vmatpush1.msra.mxu0 0.0
    %122 = vmatprep.subr.mxu0 0.0
    %123 = vmatpush1.msra.mxu0 0.0
    %124 = vmatprep.subr.mxu0 0.0
    %125 = vmatpush1.msra.mxu0 0.0
    %126 = vmatprep.subr.mxu0 0.0
    %127 = vmatpush1.msra.mxu0 0.0
    %128 = vmatprep.subr.mxu0 0.0
    %129 = vmatpush1.msra.mxu0 0.0
    %130 = vmatprep.subr.mxu0 0.0
    %131 = vmatpush1.msra.mxu0 0.0
    %132 = vmatprep.subr.mxu0 0.0
    %133 = vmatpush1.msra.mxu0 0.0
    %134 = vmatprep.mubr.f32.mxu0 0.0
    %135 = vmatmul.mubr.f32.gmra.mrb[0].mxu0 %v47
    %v136 = vpop.f32.mrb[0].mxu0
    %v137 = vadd.f32 %v43, %v136
    %v138 = vpop.f32.mrb[0].mxu0
    %139 = vmatprep.mubr.f32.mxu0 0.0
    %140 = vmatmul.mubr.f32.gmra.mrb[0].mxu0 %v50
    %v141 = vpop.f32.mrb[0].mxu0
    %v142 = vadd.f32 %v43, %v141
    %v143 = vpop.f32.mrb[0].mxu0
    %144 = vmatprep.mubr.f32.mxu0 0.0
    %145 = vmatmul.mubr.f32.gmra.mrb[0].mxu0 %v53
    %v146 = vpop.f32.mrb[0].mxu0
    %v147 = vadd.f32 %v43, %v146
    %v148 = vpop.f32.mrb[0].mxu0
    %149 = vmatprep.mubr.f32.mxu0 0.0
    %150 = vmatmul.mubr.f32.gmra.mrb[0].mxu0 %v56
    %v151 = vpop.f32.mrb[0].mxu0
    %v152 = vadd.f32 %v43, %v151
    %v153 = vpop.f32.mrb[0].mxu0
    %154 = vmatprep.mubr.f32.mxu0 0.0
    %155 = vmatmul.mubr.f32.gmra.mrb[0].mxu0 %v59
    %v156 = vpop.f32.mrb[0].mxu0
    %v157 = vadd.f32 %v43, %v156
    %v158 = vpop.f32.mrb[0].mxu0
    %159 = vmatprep.mubr.f32.mxu0 0.0
    %160 = vmatmul.mubr.f32.gmra.mrb[0].mxu0 %v62
    %v161 = vpop.f32.mrb[0].mxu0
    %v162 = vadd.f32 %v43, %v161
    %v163 = vpop.f32.mrb[0].mxu0
    %164 = vmatprep.mubr.f32.mxu0 0.0
    %165 = vmatmul.mubr.f32.gmra.mrb[0].mxu0 %v65
    %v166 = vpop.f32.mrb[0].mxu0
    %v167 = vadd.f32 %v43, %v166
    %v168 = vpop.f32.mrb[0].mxu0
    %169 = vmatprep.mubr.f32.mxu0 0.0
    %170 = vmatmul.mubr.f32.gmra.mrb[0].mxu0 %v68
    %v171 = vpop.f32.mrb[0].mxu0
    %v172 = vadd.f32 %v43, %v171
    %v173 = vpop.f32.mrb[0].mxu0
    %174 = vdwg.mxu0
    %175 = vst [vmem:[#allocation2] sm:$0xff] %v137
    %176 = vst [vmem:[#allocation2 + $0x8] sm:$0xff] %v142
    %177 = vst [vmem:[#allocation2 + $0x10] sm:$0xff] %v147
    %178 = vst [vmem:[#allocation2 + $0x18] sm:$0xff] %v152
    %179 = vst [vmem:[#allocation2 + $0x20] sm:$0xff] %v157
    %180 = vst [vmem:[#allocation2 + $0x28] sm:$0xff] %v162
    %181 = vst [vmem:[#allocation2 + $0x30] sm:$0xff] %v167
    %182 = vst [vmem:[#allocation2 + $0x38] sm:$0xff] %v172
    %v183 = vld [vmem:[%s3] sm:$0xff]
    %v184 = vld [vmem:[%s3 + $0x8] sm:$0xff]
    %v185 = vld [vmem:[%s3 + $0x10] sm:$0xff]
    %v186 = vld [vmem:[%s3 + $0x18] sm:$0xff]
    %v187 = vld [vmem:[%s1] sm:$0xff]
    %v188 = vlaneseq
    %v189 = vand.u32 %v188, 127
    %vm190 = vcmp.ge.s32.totalorder %v189, 64
    %vm191 = vcmp.lt.s32.totalorder %v189, 96
    %vm192 = vmand %vm190, %vm191
    %v193 = vsel %vm192, 1.0, 0.5
    %v194 = vsel %vm192, 0.0, 0.5
    %s195 = smul.u32 0, 8
    %v196 = vld [vmem:[#allocation4] sm:$0xff]
    %v197 = vld [vmem:[#allocation3] sm:$0xff]
    %v198 = vld [vmem:[#allocation2] sm:$0xff]
    %vm199 = vcmask 261120
    %v201 = vsel %vm199, %v196, 0
    %203 = vmatprep.subr.mxu0 0.0
    %204 = vmatpush1.msra.mxu0 %v183
    %205 = vmatprep.subr.mxu0 0.0
    %206 = vmatpush1.msra.mxu0 %v184
    %207 = vmatprep.subr.mxu0 0.0
    %208 = vmatpush1.msra.mxu0 %v185
    %209 = vmatprep.subr.mxu0 0.0
    %210 = vmatpush1.msra.mxu0 %v186
    %211 = vmatprep.subr.mxu0 0.0
    %212 = vmatpush1.msra.mxu0 0.0
    %213 = vmatprep.subr.mxu0 0.0
    %214 = vmatpush1.msra.mxu0 0.0
    %215 = vmatprep.subr.mxu0 0.0
    %216 = vmatpush1.msra.mxu0 0.0
    %217 = vmatprep.subr.mxu0 0.0
    %218 = vmatpush1.msra.mxu0 0.0
    %219 = vmatprep.subr.mxu0 0.0
    %220 = vmatpush1.msra.mxu0 0.0
    %221 = vmatprep.subr.mxu0 0.0
    %222 = vmatpush1.msra.mxu0 0.0
    %223 = vmatprep.subr.mxu0 0.0
    %224 = vmatpush1.msra.mxu0 0.0
    %225 = vmatprep.subr.mxu0 0.0
    %226 = vmatpush1.msra.mxu0 0.0
    %227 = vmatprep.subr.mxu0 0.0
    %228 = vmatpush1.msra.mxu0 0.0
    %229 = vmatprep.subr.mxu0 0.0
    %230 = vmatpush1.msra.mxu0 0.0
    %231 = vmatprep.subr.mxu0 0.0
    %232 = vmatpush1.msra.mxu0 0.0
    %233 = vmatprep.subr.mxu0 0.0
    %234 = vmatpush1.msra.mxu0 0.0
    %235 = vmatprep.subr.mxu0 0.0
    %236 = vmatpush1.msra.mxu0 0.0
    %237 = vmatprep.subr.mxu0 0.0
    %238 = vmatpush1.msra.mxu0 0.0
    %239 = vmatprep.subr.mxu0 0.0
    %240 = vmatpush1.msra.mxu0 0.0
    %241 = vmatprep.subr.mxu0 0.0
    %242 = vmatpush1.msra.mxu0 0.0
    %243 = vmatprep.subr.mxu0 0.0
    %244 = vmatpush1.msra.mxu0 0.0
    %245 = vmatprep.subr.mxu0 0.0
    %246 = vmatpush1.msra.mxu0 0.0
    %247 = vmatprep.subr.mxu0 0.0
    %248 = vmatpush1.msra.mxu0 0.0
    %249 = vmatprep.subr.mxu0 0.0
    %250 = vmatpush1.msra.mxu0 0.0
    %251 = vmatprep.subr.mxu0 0.0
    %252 = vmatpush1.msra.mxu0 0.0
    %253 = vmatprep.subr.mxu0 0.0
    %254 = vmatpush1.msra.mxu0 0.0
    %255 = vmatprep.subr.mxu0 0.0
    %256 = vmatpush1.msra.mxu0 0.0
    %257 = vmatprep.subr.mxu0 0.0
    %258 = vmatpush1.msra.mxu0 0.0
    %259 = vmatprep.subr.mxu0 0.0
    %260 = vmatpush1.msra.mxu0 0.0
    %261 = vmatprep.subr.mxu0 0.0
    %262 = vmatpush1.msra.mxu0 0.0
    %263 = vmatprep.subr.mxu0 0.0
    %264 = vmatpush1.msra.mxu0 0.0
    %265 = vmatprep.subr.mxu0 0.0
    %266 = vmatpush1.msra.mxu0 0.0
    %267 = vmatprep.mubr.f32.mxu0 0.0
    %268 = vmatmul.mubr.f32.gmra.mrb[0].mxu0 %v201
    %v269 = vpop.f32.mrb[0].mxu0
    %v270 = vadd.f32 0.0, %v269
    %v271 = vpop.f32.mrb[0].mxu0
    %272 = vdwg.mxu0
    %v273 = vadd.f32 %v198, %v270
    %v274 = vmul.f32 %v273, %v193
    %v275 = vtanh.pop %v274
    %v276 = vmul.f32 %v275, %v193
    %v277 = vadd.f32 %v276, %v194
    %279 = vrot.lane.b32.xlu0 %v197, 32
    %v280 = vpop.permute.xlu0 %279
    %v282 = vmul.f32 %v277, %v280
    %284 = vrot.lane.b32.xlu0 %v277, 64
    %v285 = vpop.permute.xlu0 %284
    %v287 = vmul.f32 %v277, %v285
    %289 = vrot.lane.b32.xlu0 %v287, 32
    %v290 = vpop.permute.xlu0 %289
    %v292 = vadd.f32 %v282, %v290
    %v293 = vtanh.pop %v292
    %295 = vrot.lane.b32.xlu0 %v293, 64
    %v296 = vpop.permute.xlu0 %295
    %v298 = vmul.f32 %v277, %v296
    %v299 = vstv %s195
    %vm300 = vcmp.lt.s32.totalorder %v299, %v187
    %v301 = vsel %vm300, 1, 0
    %302 = vset.pattern.permute.xlu0 0
    %303 = vperm.xlu0 %302, %v301
    %v304 = vpop.permute.xlu0 %303
    %vm305 = vcmp.eq.s32.totalorder %v304, 1
    %306 = vrot.lane.b32.xlu0 %v196, 96
    %v307 = vpop.permute.xlu0 %306
    %v309 = vsel %vm305, %v298, %v307
    %s310 = scalar_lea.vmem [#allocation2], 8
    %v311 = vld [vmem:[%s310] sm:$0xff]
    %313 = vrot.lane.b32.xlu0 %v309, 32
    %v314 = vpop.permute.xlu0 %313
    %v315 = vsel %vm199, %v314, 0
    %317 = vmatprep.subr.mxu0 0.0
    %318 = vmatpush1.msra.mxu0 %v183
    %319 = vmatprep.subr.mxu0 0.0
    %320 = vmatpush1.msra.mxu0 %v184
    %321 = vmatprep.subr.mxu0 0.0
    %322 = vmatpush1.msra.mxu0 %v185
    %323 = vmatprep.subr.mxu0 0.0
    %324 = vmatpush1.msra.mxu0 %v186
    %325 = vmatprep.subr.mxu0 0.0
    %326 = vmatpush1.msra.mxu0 0.0
    %327 = vmatprep.subr.mxu0 0.0
    %328 = vmatpush1.msra.mxu0 0.0
    %329 = vmatprep.subr.mxu0 0.0
    %330 = vmatpush1.msra.mxu0 0.0
    %331 = vmatprep.subr.mxu0 0.0
    %332 = vmatpush1.msra.mxu0 0.0
    %333 = vmatprep.subr.mxu0 0.0
    %334 = vmatpush1.msra.mxu0 0.0
    %335 = vmatprep.subr.mxu0 0.0
    %336 = vmatpush1.msra.mxu0 0.0
    %337 = vmatprep.subr.mxu0 0.0
    %338 = vmatpush1.msra.mxu0 0.0
    %339 = vmatprep.subr.mxu0 0.0
    %340 = vmatpush1.msra.mxu0 0.0
    %341 = vmatprep.subr.mxu0 0.0
    %342 = vmatpush1.msra.mxu0 0.0
    %343 = vmatprep.subr.mxu0 0.0
    %344 = vmatpush1.msra.mxu0 0.0
    %345 = vmatprep.subr.mxu0 0.0
    %346 = vmatpush1.msra.mxu0 0.0
    %347 = vmatprep.subr.mxu0 0.0
    %348 = vmatpush1.msra.mxu0 0.0
    %349 = vmatprep.subr.mxu0 0.0
    %350 = vmatpush1.msra.mxu0 0.0
    %351 = vmatprep.subr.mxu0 0.0
    %352 = vmatpush1.msra.mxu0 0.0
    %353 = vmatprep.subr.mxu0 0.0
    %354 = vmatpush1.msra.mxu0 0.0
    %355 = vmatprep.subr.mxu0 0.0
    %356 = vmatpush1.msra.mxu0 0.0
    %357 = vmatprep.subr.mxu0 0.0
    %358 = vmatpush1.msra.mxu0 0.0
    %359 = vmatprep.subr.mxu0 0.0
    %360 = vmatpush1.msra.mxu0 0.0
    %361 = vmatprep.subr.mxu0 0.0
    %362 = vmatpush1.msra.mxu0 0.0
    %363 = vmatprep.subr.mxu0 0.0
    %364 = vmatpush1.msra.mxu0 0.0
    %365 = vmatprep.subr.mxu0 0.0
    %366 = vmatpush1.msra.mxu0 0.0
    %367 = vmatprep.subr.mxu0 0.0
    %368 = vmatpush1.msra.mxu0 0.0
    %369 = vmatprep.subr.mxu0 0.0
    %370 = vmatpush1.msra.mxu0 0.0
    %371 = vmatprep.subr.mxu0 0.0
    %372 = vmatpush1.msra.mxu0 0.0
    %373 = vmatprep.subr.mxu0 0.0
    %374 = vmatpush1.msra.mxu0 0.0
    %375 = vmatprep.subr.mxu0 0.0
    %376 = vmatpush1.msra.mxu0 0.0
    %377 = vmatprep.subr.mxu0 0.0
    %378 = vmatpush1.msra.mxu0 0.0
    %379 = vmatprep.subr.mxu0 0.0
    %380 = vmatpush1.msra.mxu0 0.0
    %381 = vmatprep.mubr.f32.mxu0 0.0
    %382 = vmatmul.mubr.f32.gmra.mrb[0].mxu0 %v315
    %v383 = vpop.f32.mrb[0].mxu0
    %v384 = vadd.f32 0.0, %v383
    %v385 = vpop.f32.mrb[0].mxu0
    %386 = vdwg.mxu0
    %v387 = vadd.f32 %v311, %v384
    %v388 = vmul.f32 %v387, %v193
    %v389 = vtanh.pop %v388
    %v390 = vmul.f32 %v389, %v193
    %v391 = vadd.f32 %v390, %v194
    %v392 = vmul.f32 %v391, %v292
    %394 = vrot.lane.b32.xlu0 %v391, 64
    %v395 = vpop.permute.xlu0 %394
    %v397 = vmul.f32 %v391, %v395
    %399 = vrot.lane.b32.xlu0 %v397, 32
    %v400 = vpop.permute.xlu0 %399
    %v402 = vadd.f32 %v392, %v400
    %v403 = vtanh.pop %v402
    %405 = vrot.lane.b32.xlu0 %v403, 64
    %v406 = vpop.permute.xlu0 %405
    %v408 = vmul.f32 %v391, %v406
    %s409 = sadd.s32 %s195, 1
    %v410 = vstv %s409
    %vm411 = vcmp.lt.s32.totalorder %v410, %v187
    %v412 = vsel %vm411, 1, 0
    %413 = vset.pattern.permute.xlu0 0
    %414 = vperm.xlu0 %413, %v412
    %v415 = vpop.permute.xlu0 %414
    %vm416 = vcmp.eq.s32.totalorder %v415, 1
    %v417 = vsel %vm416, %v408, %v309
    %s418 = scalar_lea.vmem [#allocation2], 16
    %v419 = vld [vmem:[%s418] sm:$0xff]
    %421 = vrot.lane.b32.xlu0 %v417, 32
    %v422 = vpop.permute.xlu0 %421
    %v423 = vsel %vm199, %v422, 0
    %425 = vmatprep.subr.mxu0 0.0
    %426 = vmatpush1.msra.mxu0 %v183
    %427 = vmatprep.subr.mxu0 0.0
    %428 = vmatpush1.msra.mxu0 %v184
    %429 = vmatprep.subr.mxu0 0.0
    %430 = vmatpush1.msra.mxu0 %v185
    %431 = vmatprep.subr.mxu0 0.0
    %432 = vmatpush1.msra.mxu0 %v186
    %433 = vmatprep.subr.mxu0 0.0
    %434 = vmatpush1.msra.mxu0 0.0
    %435 = vmatprep.subr.mxu0 0.0
    %436 = vmatpush1.msra.mxu0 0.0
    %437 = vmatprep.subr.mxu0 0.0
    %438 = vmatpush1.msra.mxu0 0.0
    %439 = vmatprep.subr.mxu0 0.0
    %440 = vmatpush1.msra.mxu0 0.0
    %441 = vmatprep.subr.mxu0 0.0
    %442 = vmatpush1.msra.mxu0 0.0
    %443 = vmatprep.subr.mxu0 0.0
    %444 = vmatpush1.msra.mxu0 0.0
    %445 = vmatprep.subr.mxu0 0.0
    %446 = vmatpush1.msra.mxu0 0.0
    %447 = vmatprep.subr.mxu0 0.0
    %448 = vmatpush1.msra.mxu0 0.0
    %449 = vmatprep.subr.mxu0 0.0
    %450 = vmatpush1.msra.mxu0 0.0
    %451 = vmatprep.subr.mxu0 0.0
    %452 = vmatpush1.msra.mxu0 0.0
    %453 = vmatprep.subr.mxu0 0.0
    %454 = vmatpush1.msra.mxu0 0.0
    %455 = vmatprep.subr.mxu0 0.0
    %456 = vmatpush1.msra.mxu0 0.0
    %457 = vmatprep.subr.mxu0 0.0
    %458 = vmatpush1.msra.mxu0 0.0
    %459 = vmatprep.subr.mxu0 0.0
    %460 = vmatpush1.msra.mxu0 0.0
    %461 = vmatprep.subr.mxu0 0.0
    %462 = vmatpush1.msra.mxu0 0.0
    %463 = vmatprep.subr.mxu0 0.0
    %464 = vmatpush1.msra.mxu0 0.0
    %465 = vmatprep.subr.mxu0 0.0
    %466 = vmatpush1.msra.mxu0 0.0
    %467 = vmatprep.subr.mxu0 0.0
    %468 = vmatpush1.msra.mxu0 0.0
    %469 = vmatprep.subr.mxu0 0.0
    %470 = vmatpush1.msra.mxu0 0.0
    %471 = vmatprep.subr.mxu0 0.0
    %472 = vmatpush1.msra.mxu0 0.0
    %473 = vmatprep.subr.mxu0 0.0
    %474 = vmatpush1.msra.mxu0 0.0
    %475 = vmatprep.subr.mxu0 0.0
    %476 = vmatpush1.msra.mxu0 0.0
    %477 = vmatprep.subr.mxu0 0.0
    %478 = vmatpush1.msra.mxu0 0.0
    %479 = vmatprep.subr.mxu0 0.0
    %480 = vmatpush1.msra.mxu0 0.0
    %481 = vmatprep.subr.mxu0 0.0
    %482 = vmatpush1.msra.mxu0 0.0
    %483 = vmatprep.subr.mxu0 0.0
    %484 = vmatpush1.msra.mxu0 0.0
    %485 = vmatprep.subr.mxu0 0.0
    %486 = vmatpush1.msra.mxu0 0.0
    %487 = vmatprep.subr.mxu0 0.0
    %488 = vmatpush1.msra.mxu0 0.0
    %489 = vmatprep.mubr.f32.mxu0 0.0
    %490 = vmatmul.mubr.f32.gmra.mrb[0].mxu0 %v423
    %v491 = vpop.f32.mrb[0].mxu0
    %v492 = vadd.f32 0.0, %v491
    %v493 = vpop.f32.mrb[0].mxu0
    %494 = vdwg.mxu0
    %v495 = vadd.f32 %v419, %v492
    %v496 = vmul.f32 %v495, %v193
    %v497 = vtanh.pop %v496
    %v498 = vmul.f32 %v497, %v193
    %v499 = vadd.f32 %v498, %v194
    %v500 = vmul.f32 %v499, %v402
    %502 = vrot.lane.b32.xlu0 %v499, 64
    %v503 = vpop.permute.xlu0 %502
    %v505 = vmul.f32 %v499, %v503
    %507 = vrot.lane.b32.xlu0 %v505, 32
    %v508 = vpop.permute.xlu0 %507
    %v510 = vadd.f32 %v500, %v508
    %v511 = vtanh.pop %v510
    %513 = vrot.lane.b32.xlu0 %v511, 64
    %v514 = vpop.permute.xlu0 %513
    %v516 = vmul.f32 %v499, %v514
    %s517 = sadd.s32 %s195, 2
    %v518 = vstv %s517
    %vm519 = vcmp.lt.s32.totalorder %v518, %v187
    %v520 = vsel %vm519, 1, 0
    %521 = vset.pattern.permute.xlu0 0
    %522 = vperm.xlu0 %521, %v520
    %v523 = vpop.permute.xlu0 %522
    %vm524 = vcmp.eq.s32.totalorder %v523, 1
    %v525 = vsel %vm524, %v516, %v417
    %s526 = scalar_lea.vmem [#allocation2], 24
    %v527 = vld [vmem:[%s526] sm:$0xff]
    %529 = vrot.lane.b32.xlu0 %v525, 32
    %v530 = vpop.permute.xlu0 %529
    %v531 = vsel %vm199, %v530, 0
    %533 = vmatprep.subr.mxu0 0.0
    %534 = vmatpush1.msra.mxu0 %v183
    %535 = vmatprep.subr.mxu0 0.0
    %536 = vmatpush1.msra.mxu0 %v184
    %537 = vmatprep.subr.mxu0 0.0
    %538 = vmatpush1.msra.mxu0 %v185
    %539 = vmatprep.subr.mxu0 0.0
    %540 = vmatpush1.msra.mxu0 %v186
    %541 = vmatprep.subr.mxu0 0.0
    %542 = vmatpush1.msra.mxu0 0.0
    %543 = vmatprep.subr.mxu0 0.0
    %544 = vmatpush1.msra.mxu0 0.0
    %545 = vmatprep.subr.mxu0 0.0
    %546 = vmatpush1.msra.mxu0 0.0
    %547 = vmatprep.subr.mxu0 0.0
    %548 = vmatpush1.msra.mxu0 0.0
    %549 = vmatprep.subr.mxu0 0.0
    %550 = vmatpush1.msra.mxu0 0.0
    %551 = vmatprep.subr.mxu0 0.0
    %552 = vmatpush1.msra.mxu0 0.0
    %553 = vmatprep.subr.mxu0 0.0
    %554 = vmatpush1.msra.mxu0 0.0
    %555 = vmatprep.subr.mxu0 0.0
    %556 = vmatpush1.msra.mxu0 0.0
    %557 = vmatprep.subr.mxu0 0.0
    %558 = vmatpush1.msra.mxu0 0.0
    %559 = vmatprep.subr.mxu0 0.0
    %560 = vmatpush1.msra.mxu0 0.0
    %561 = vmatprep.subr.mxu0 0.0
    %562 = vmatpush1.msra.mxu0 0.0
    %563 = vmatprep.subr.mxu0 0.0
    %564 = vmatpush1.msra.mxu0 0.0
    %565 = vmatprep.subr.mxu0 0.0
    %566 = vmatpush1.msra.mxu0 0.0
    %567 = vmatprep.subr.mxu0 0.0
    %568 = vmatpush1.msra.mxu0 0.0
    %569 = vmatprep.subr.mxu0 0.0
    %570 = vmatpush1.msra.mxu0 0.0
    %571 = vmatprep.subr.mxu0 0.0
    %572 = vmatpush1.msra.mxu0 0.0
    %573 = vmatprep.subr.mxu0 0.0
    %574 = vmatpush1.msra.mxu0 0.0
    %575 = vmatprep.subr.mxu0 0.0
    %576 = vmatpush1.msra.mxu0 0.0
    %577 = vmatprep.subr.mxu0 0.0
    %578 = vmatpush1.msra.mxu0 0.0
    %579 = vmatprep.subr.mxu0 0.0
    %580 = vmatpush1.msra.mxu0 0.0
    %581 = vmatprep.subr.mxu0 0.0
    %582 = vmatpush1.msra.mxu0 0.0
    %583 = vmatprep.subr.mxu0 0.0
    %584 = vmatpush1.msra.mxu0 0.0
    %585 = vmatprep.subr.mxu0 0.0
    %586 = vmatpush1.msra.mxu0 0.0
    %587 = vmatprep.subr.mxu0 0.0
    %588 = vmatpush1.msra.mxu0 0.0
    %589 = vmatprep.subr.mxu0 0.0
    %590 = vmatpush1.msra.mxu0 0.0
    %591 = vmatprep.subr.mxu0 0.0
    %592 = vmatpush1.msra.mxu0 0.0
    %593 = vmatprep.subr.mxu0 0.0
    %594 = vmatpush1.msra.mxu0 0.0
    %595 = vmatprep.subr.mxu0 0.0
    %596 = vmatpush1.msra.mxu0 0.0
    %597 = vmatprep.mubr.f32.mxu0 0.0
    %598 = vmatmul.mubr.f32.gmra.mrb[0].mxu0 %v531
    %v599 = vpop.f32.mrb[0].mxu0
    %v600 = vadd.f32 0.0, %v599
    %v601 = vpop.f32.mrb[0].mxu0
    %602 = vdwg.mxu0
    %v603 = vadd.f32 %v527, %v600
    %v604 = vmul.f32 %v603, %v193
    %v605 = vtanh.pop %v604
    %v606 = vmul.f32 %v605, %v193
    %v607 = vadd.f32 %v606, %v194
    %v608 = vmul.f32 %v607, %v510
    %610 = vrot.lane.b32.xlu0 %v607, 64
    %v611 = vpop.permute.xlu0 %610
    %v613 = vmul.f32 %v607, %v611
    %615 = vrot.lane.b32.xlu0 %v613, 32
    %v616 = vpop.permute.xlu0 %615
    %v618 = vadd.f32 %v608, %v616
    %v619 = vtanh.pop %v618
    %621 = vrot.lane.b32.xlu0 %v619, 64
    %v622 = vpop.permute.xlu0 %621
    %v624 = vmul.f32 %v607, %v622
    %s625 = sadd.s32 %s195, 3
    %v626 = vstv %s625
    %vm627 = vcmp.lt.s32.totalorder %v626, %v187
    %v628 = vsel %vm627, 1, 0
    %629 = vset.pattern.permute.xlu0 0
    %630 = vperm.xlu0 %629, %v628
    %v631 = vpop.permute.xlu0 %630
    %vm632 = vcmp.eq.s32.totalorder %v631, 1
    %v633 = vsel %vm632, %v624, %v525
    %s634 = scalar_lea.vmem [#allocation2], 32
    %v635 = vld [vmem:[%s634] sm:$0xff]
    %637 = vrot.lane.b32.xlu0 %v633, 32
    %v638 = vpop.permute.xlu0 %637
    %v639 = vsel %vm199, %v638, 0
    %641 = vmatprep.subr.mxu0 0.0
    %642 = vmatpush1.msra.mxu0 %v183
    %643 = vmatprep.subr.mxu0 0.0
    %644 = vmatpush1.msra.mxu0 %v184
    %645 = vmatprep.subr.mxu0 0.0
    %646 = vmatpush1.msra.mxu0 %v185
    %647 = vmatprep.subr.mxu0 0.0
    %648 = vmatpush1.msra.mxu0 %v186
    %649 = vmatprep.subr.mxu0 0.0
    %650 = vmatpush1.msra.mxu0 0.0
    %651 = vmatprep.subr.mxu0 0.0
    %652 = vmatpush1.msra.mxu0 0.0
    %653 = vmatprep.subr.mxu0 0.0
    %654 = vmatpush1.msra.mxu0 0.0
    %655 = vmatprep.subr.mxu0 0.0
    %656 = vmatpush1.msra.mxu0 0.0
    %657 = vmatprep.subr.mxu0 0.0
    %658 = vmatpush1.msra.mxu0 0.0
    %659 = vmatprep.subr.mxu0 0.0
    %660 = vmatpush1.msra.mxu0 0.0
    %661 = vmatprep.subr.mxu0 0.0
    %662 = vmatpush1.msra.mxu0 0.0
    %663 = vmatprep.subr.mxu0 0.0
    %664 = vmatpush1.msra.mxu0 0.0
    %665 = vmatprep.subr.mxu0 0.0
    %666 = vmatpush1.msra.mxu0 0.0
    %667 = vmatprep.subr.mxu0 0.0
    %668 = vmatpush1.msra.mxu0 0.0
    %669 = vmatprep.subr.mxu0 0.0
    %670 = vmatpush1.msra.mxu0 0.0
    %671 = vmatprep.subr.mxu0 0.0
    %672 = vmatpush1.msra.mxu0 0.0
    %673 = vmatprep.subr.mxu0 0.0
    %674 = vmatpush1.msra.mxu0 0.0
    %675 = vmatprep.subr.mxu0 0.0
    %676 = vmatpush1.msra.mxu0 0.0
    %677 = vmatprep.subr.mxu0 0.0
    %678 = vmatpush1.msra.mxu0 0.0
    %679 = vmatprep.subr.mxu0 0.0
    %680 = vmatpush1.msra.mxu0 0.0
    %681 = vmatprep.subr.mxu0 0.0
    %682 = vmatpush1.msra.mxu0 0.0
    %683 = vmatprep.subr.mxu0 0.0
    %684 = vmatpush1.msra.mxu0 0.0
    %685 = vmatprep.subr.mxu0 0.0
    %686 = vmatpush1.msra.mxu0 0.0
    %687 = vmatprep.subr.mxu0 0.0
    %688 = vmatpush1.msra.mxu0 0.0
    %689 = vmatprep.subr.mxu0 0.0
    %690 = vmatpush1.msra.mxu0 0.0
    %691 = vmatprep.subr.mxu0 0.0
    %692 = vmatpush1.msra.mxu0 0.0
    %693 = vmatprep.subr.mxu0 0.0
    %694 = vmatpush1.msra.mxu0 0.0
    %695 = vmatprep.subr.mxu0 0.0
    %696 = vmatpush1.msra.mxu0 0.0
    %697 = vmatprep.subr.mxu0 0.0
    %698 = vmatpush1.msra.mxu0 0.0
    %699 = vmatprep.subr.mxu0 0.0
    %700 = vmatpush1.msra.mxu0 0.0
    %701 = vmatprep.subr.mxu0 0.0
    %702 = vmatpush1.msra.mxu0 0.0
    %703 = vmatprep.subr.mxu0 0.0
    %704 = vmatpush1.msra.mxu0 0.0
    %705 = vmatprep.mubr.f32.mxu0 0.0
    %706 = vmatmul.mubr.f32.gmra.mrb[0].mxu0 %v639
    %v707 = vpop.f32.mrb[0].mxu0
    %v708 = vadd.f32 0.0, %v707
    %v709 = vpop.f32.mrb[0].mxu0
    %710 = vdwg.mxu0
    %v711 = vadd.f32 %v635, %v708
    %v712 = vmul.f32 %v711, %v193
    %v713 = vtanh.pop %v712
    %v714 = vmul.f32 %v713, %v193
    %v715 = vadd.f32 %v714, %v194
    %v716 = vmul.f32 %v715, %v618
    %718 = vrot.lane.b32.xlu0 %v715, 64
    %v719 = vpop.permute.xlu0 %718
    %v721 = vmul.f32 %v715, %v719
    %723 = vrot.lane.b32.xlu0 %v721, 32
    %v724 = vpop.permute.xlu0 %723
    %v726 = vadd.f32 %v716, %v724
    %v727 = vtanh.pop %v726
    %729 = vrot.lane.b32.xlu0 %v727, 64
    %v730 = vpop.permute.xlu0 %729
    %v732 = vmul.f32 %v715, %v730
    %s733 = sadd.s32 %s195, 4
    %v734 = vstv %s733
    %vm735 = vcmp.lt.s32.totalorder %v734, %v187
    %v736 = vsel %vm735, 1, 0
    %737 = vset.pattern.permute.xlu0 0
    %738 = vperm.xlu0 %737, %v736
    %v739 = vpop.permute.xlu0 %738
    %vm740 = vcmp.eq.s32.totalorder %v739, 1
    %v741 = vsel %vm740, %v732, %v633
    %s742 = scalar_lea.vmem [#allocation2], 40
    %v743 = vld [vmem:[%s742] sm:$0xff]
    %745 = vrot.lane.b32.xlu0 %v741, 32
    %v746 = vpop.permute.xlu0 %745
    %v747 = vsel %vm199, %v746, 0
    %749 = vmatprep.subr.mxu0 0.0
    %750 = vmatpush1.msra.mxu0 %v183
    %751 = vmatprep.subr.mxu0 0.0
    %752 = vmatpush1.msra.mxu0 %v184
    %753 = vmatprep.subr.mxu0 0.0
    %754 = vmatpush1.msra.mxu0 %v185
    %755 = vmatprep.subr.mxu0 0.0
    %756 = vmatpush1.msra.mxu0 %v186
    %757 = vmatprep.subr.mxu0 0.0
    %758 = vmatpush1.msra.mxu0 0.0
    %759 = vmatprep.subr.mxu0 0.0
    %760 = vmatpush1.msra.mxu0 0.0
    %761 = vmatprep.subr.mxu0 0.0
    %762 = vmatpush1.msra.mxu0 0.0
    %763 = vmatprep.subr.mxu0 0.0
    %764 = vmatpush1.msra.mxu0 0.0
    %765 = vmatprep.subr.mxu0 0.0
    %766 = vmatpush1.msra.mxu0 0.0
    %767 = vmatprep.subr.mxu0 0.0
    %768 = vmatpush1.msra.mxu0 0.0
    %769 = vmatprep.subr.mxu0 0.0
    %770 = vmatpush1.msra.mxu0 0.0
    %771 = vmatprep.subr.mxu0 0.0
    %772 = vmatpush1.msra.mxu0 0.0
    %773 = vmatprep.subr.mxu0 0.0
    %774 = vmatpush1.msra.mxu0 0.0
    %775 = vmatprep.subr.mxu0 0.0
    %776 = vmatpush1.msra.mxu0 0.0
    %777 = vmatprep.subr.mxu0 0.0
    %778 = vmatpush1.msra.mxu0 0.0
    %779 = vmatprep.subr.mxu0 0.0
    %780 = vmatpush1.msra.mxu0 0.0
    %781 = vmatprep.subr.mxu0 0.0
    %782 = vmatpush1.msra.mxu0 0.0
    %783 = vmatprep.subr.mxu0 0.0
    %784 = vmatpush1.msra.mxu0 0.0
    %785 = vmatprep.subr.mxu0 0.0
    %786 = vmatpush1.msra.mxu0 0.0
    %787 = vmatprep.subr.mxu0 0.0
    %788 = vmatpush1.msra.mxu0 0.0
    %789 = vmatprep.subr.mxu0 0.0
    %790 = vmatpush1.msra.mxu0 0.0
    %791 = vmatprep.subr.mxu0 0.0
    %792 = vmatpush1.msra.mxu0 0.0
    %793 = vmatprep.subr.mxu0 0.0
    %794 = vmatpush1.msra.mxu0 0.0
    %795 = vmatprep.subr.mxu0 0.0
    %796 = vmatpush1.msra.mxu0 0.0
    %797 = vmatprep.subr.mxu0 0.0
    %798 = vmatpush1.msra.mxu0 0.0
    %799 = vmatprep.subr.mxu0 0.0
    %800 = vmatpush1.msra.mxu0 0.0
    %801 = vmatprep.subr.mxu0 0.0
    %802 = vmatpush1.msra.mxu0 0.0
    %803 = vmatprep.subr.mxu0 0.0
    %804 = vmatpush1.msra.mxu0 0.0
    %805 = vmatprep.subr.mxu0 0.0
    %806 = vmatpush1.msra.mxu0 0.0
    %807 = vmatprep.subr.mxu0 0.0
    %808 = vmatpush1.msra.mxu0 0.0
    %809 = vmatprep.subr.mxu0 0.0
    %810 = vmatpush1.msra.mxu0 0.0
    %811 = vmatprep.subr.mxu0 0.0
    %812 = vmatpush1.msra.mxu0 0.0
    %813 = vmatprep.mubr.f32.mxu0 0.0
    %814 = vmatmul.mubr.f32.gmra.mrb[0].mxu0 %v747
    %v815 = vpop.f32.mrb[0].mxu0
    %v816 = vadd.f32 0.0, %v815
    %v817 = vpop.f32.mrb[0].mxu0
    %818 = vdwg.mxu0
    %v819 = vadd.f32 %v743, %v816
    %v820 = vmul.f32 %v819, %v193
    %v821 = vtanh.pop %v820
    %v822 = vmul.f32 %v821, %v193
    %v823 = vadd.f32 %v822, %v194
    %v824 = vmul.f32 %v823, %v726
    %826 = vrot.lane.b32.xlu0 %v823, 64
    %v827 = vpop.permute.xlu0 %826
    %v829 = vmul.f32 %v823, %v827
    %831 = vrot.lane.b32.xlu0 %v829, 32
    %v832 = vpop.permute.xlu0 %831
    %v834 = vadd.f32 %v824, %v832
    %v835 = vtanh.pop %v834
    %837 = vrot.lane.b32.xlu0 %v835, 64
    %v838 = vpop.permute.xlu0 %837
    %v840 = vmul.f32 %v823, %v838
    %s841 = sadd.s32 %s195, 5
    %v842 = vstv %s841
    %vm843 = vcmp.lt.s32.totalorder %v842, %v187
    %v844 = vsel %vm843, 1, 0
    %845 = vset.pattern.permute.xlu0 0
    %846 = vperm.xlu0 %845, %v844
    %v847 = vpop.permute.xlu0 %846
    %vm848 = vcmp.eq.s32.totalorder %v847, 1
    %v849 = vsel %vm848, %v840, %v741
    %s850 = scalar_lea.vmem [#allocation2], 48
    %v851 = vld [vmem:[%s850] sm:$0xff]
    %853 = vrot.lane.b32.xlu0 %v849, 32
    %v854 = vpop.permute.xlu0 %853
    %v855 = vsel %vm199, %v854, 0
    %857 = vmatprep.subr.mxu0 0.0
    %858 = vmatpush1.msra.mxu0 %v183
    %859 = vmatprep.subr.mxu0 0.0
    %860 = vmatpush1.msra.mxu0 %v184
    %861 = vmatprep.subr.mxu0 0.0
    %862 = vmatpush1.msra.mxu0 %v185
    %863 = vmatprep.subr.mxu0 0.0
    %864 = vmatpush1.msra.mxu0 %v186
    %865 = vmatprep.subr.mxu0 0.0
    %866 = vmatpush1.msra.mxu0 0.0
    %867 = vmatprep.subr.mxu0 0.0
    %868 = vmatpush1.msra.mxu0 0.0
    %869 = vmatprep.subr.mxu0 0.0
    %870 = vmatpush1.msra.mxu0 0.0
    %871 = vmatprep.subr.mxu0 0.0
    %872 = vmatpush1.msra.mxu0 0.0
    %873 = vmatprep.subr.mxu0 0.0
    %874 = vmatpush1.msra.mxu0 0.0
    %875 = vmatprep.subr.mxu0 0.0
    %876 = vmatpush1.msra.mxu0 0.0
    %877 = vmatprep.subr.mxu0 0.0
    %878 = vmatpush1.msra.mxu0 0.0
    %879 = vmatprep.subr.mxu0 0.0
    %880 = vmatpush1.msra.mxu0 0.0
    %881 = vmatprep.subr.mxu0 0.0
    %882 = vmatpush1.msra.mxu0 0.0
    %883 = vmatprep.subr.mxu0 0.0
    %884 = vmatpush1.msra.mxu0 0.0
    %885 = vmatprep.subr.mxu0 0.0
    %886 = vmatpush1.msra.mxu0 0.0
    %887 = vmatprep.subr.mxu0 0.0
    %888 = vmatpush1.msra.mxu0 0.0
    %889 = vmatprep.subr.mxu0 0.0
    %890 = vmatpush1.msra.mxu0 0.0
    %891 = vmatprep.subr.mxu0 0.0
    %892 = vmatpush1.msra.mxu0 0.0
    %893 = vmatprep.subr.mxu0 0.0
    %894 = vmatpush1.msra.mxu0 0.0
    %895 = vmatprep.subr.mxu0 0.0
    %896 = vmatpush1.msra.mxu0 0.0
    %897 = vmatprep.subr.mxu0 0.0
    %898 = vmatpush1.msra.mxu0 0.0
    %899 = vmatprep.subr.mxu0 0.0
    %900 = vmatpush1.msra.mxu0 0.0
    %901 = vmatprep.subr.mxu0 0.0
    %902 = vmatpush1.msra.mxu0 0.0
    %903 = vmatprep.subr.mxu0 0.0
    %904 = vmatpush1.msra.mxu0 0.0
    %905 = vmatprep.subr.mxu0 0.0
    %906 = vmatpush1.msra.mxu0 0.0
    %907 = vmatprep.subr.mxu0 0.0
    %908 = vmatpush1.msra.mxu0 0.0
    %909 = vmatprep.subr.mxu0 0.0
    %910 = vmatpush1.msra.mxu0 0.0
    %911 = vmatprep.subr.mxu0 0.0
    %912 = vmatpush1.msra.mxu0 0.0
    %913 = vmatprep.subr.mxu0 0.0
    %914 = vmatpush1.msra.mxu0 0.0
    %915 = vmatprep.subr.mxu0 0.0
    %916 = vmatpush1.msra.mxu0 0.0
    %917 = vmatprep.subr.mxu0 0.0
    %918 = vmatpush1.msra.mxu0 0.0
    %919 = vmatprep.subr.mxu0 0.0
    %920 = vmatpush1.msra.mxu0 0.0
    %921 = vmatprep.mubr.f32.mxu0 0.0
    %922 = vmatmul.mubr.f32.gmra.mrb[0].mxu0 %v855
    %v923 = vpop.f32.mrb[0].mxu0
    %v924 = vadd.f32 0.0, %v923
    %v925 = vpop.f32.mrb[0].mxu0
    %926 = vdwg.mxu0
    %v927 = vadd.f32 %v851, %v924
    %v928 = vmul.f32 %v927, %v193
    %v929 = vtanh.pop %v928
    %v930 = vmul.f32 %v929, %v193
    %v931 = vadd.f32 %v930, %v194
    %v932 = vmul.f32 %v931, %v834
    %934 = vrot.lane.b32.xlu0 %v931, 64
    %v935 = vpop.permute.xlu0 %934
    %v937 = vmul.f32 %v931, %v935
    %939 = vrot.lane.b32.xlu0 %v937, 32
    %v940 = vpop.permute.xlu0 %939
    %v942 = vadd.f32 %v932, %v940
    %v943 = vtanh.pop %v942
    %945 = vrot.lane.b32.xlu0 %v943, 64
    %v946 = vpop.permute.xlu0 %945
    %v948 = vmul.f32 %v931, %v946
    %s949 = sadd.s32 %s195, 6
    %v950 = vstv %s949
    %vm951 = vcmp.lt.s32.totalorder %v950, %v187
    %v952 = vsel %vm951, 1, 0
    %953 = vset.pattern.permute.xlu0 0
    %954 = vperm.xlu0 %953, %v952
    %v955 = vpop.permute.xlu0 %954
    %vm956 = vcmp.eq.s32.totalorder %v955, 1
    %v957 = vsel %vm956, %v948, %v849
    %s958 = scalar_lea.vmem [#allocation2], 56
    %v959 = vld [vmem:[%s958] sm:$0xff]
    %961 = vrot.lane.b32.xlu0 %v957, 32
    %v962 = vpop.permute.xlu0 %961
    %v963 = vsel %vm199, %v962, 0
    %965 = vmatprep.subr.mxu0 0.0
    %966 = vmatpush1.msra.mxu0 %v183
    %967 = vmatprep.subr.mxu0 0.0
    %968 = vmatpush1.msra.mxu0 %v184
    %969 = vmatprep.subr.mxu0 0.0
    %970 = vmatpush1.msra.mxu0 %v185
    %971 = vmatprep.subr.mxu0 0.0
    %972 = vmatpush1.msra.mxu0 %v186
    %973 = vmatprep.subr.mxu0 0.0
    %974 = vmatpush1.msra.mxu0 0.0
    %975 = vmatprep.subr.mxu0 0.0
    %976 = vmatpush1.msra.mxu0 0.0
    %977 = vmatprep.subr.mxu0 0.0
    %978 = vmatpush1.msra.mxu0 0.0
    %979 = vmatprep.subr.mxu0 0.0
    %980 = vmatpush1.msra.mxu0 0.0
    %981 = vmatprep.subr.mxu0 0.0
    %982 = vmatpush1.msra.mxu0 0.0
    %983 = vmatprep.subr.mxu0 0.0
    %984 = vmatpush1.msra.mxu0 0.0
    %985 = vmatprep.subr.mxu0 0.0
    %986 = vmatpush1.msra.mxu0 0.0
    %987 = vmatprep.subr.mxu0 0.0
    %988 = vmatpush1.msra.mxu0 0.0
    %989 = vmatprep.subr.mxu0 0.0
    %990 = vmatpush1.msra.mxu0 0.0
    %991 = vmatprep.subr.mxu0 0.0
    %992 = vmatpush1.msra.mxu0 0.0
    %993 = vmatprep.subr.mxu0 0.0
    %994 = vmatpush1.msra.mxu0 0.0
    %995 = vmatprep.subr.mxu0 0.0
    %996 = vmatpush1.msra.mxu0 0.0
    %997 = vmatprep.subr.mxu0 0.0
    %998 = vmatpush1.msra.mxu0 0.0
    %999 = vmatprep.subr.mxu0 0.0
    %1000 = vmatpush1.msra.mxu0 0.0
    %1001 = vmatprep.subr.mxu0 0.0
    %1002 = vmatpush1.msra.mxu0 0.0
    %1003 = vmatprep.subr.mxu0 0.0
    %1004 = vmatpush1.msra.mxu0 0.0
    %1005 = vmatprep.subr.mxu0 0.0
    %1006 = vmatpush1.msra.mxu0 0.0
    %1007 = vmatprep.subr.mxu0 0.0
    %1008 = vmatpush1.msra.mxu0 0.0
    %1009 = vmatprep.subr.mxu0 0.0
    %1010 = vmatpush1.msra.mxu0 0.0
    %1011 = vmatprep.subr.mxu0 0.0
    %1012 = vmatpush1.msra.mxu0 0.0
    %1013 = vmatprep.subr.mxu0 0.0
    %1014 = vmatpush1.msra.mxu0 0.0
    %1015 = vmatprep.subr.mxu0 0.0
    %1016 = vmatpush1.msra.mxu0 0.0
    %1017 = vmatprep.subr.mxu0 0.0
    %1018 = vmatpush1.msra.mxu0 0.0
    %1019 = vmatprep.subr.mxu0 0.0
    %1020 = vmatpush1.msra.mxu0 0.0
    %1021 = vmatprep.subr.mxu0 0.0
    %1022 = vmatpush1.msra.mxu0 0.0
    %1023 = vmatprep.subr.mxu0 0.0
    %1024 = vmatpush1.msra.mxu0 0.0
    %1025 = vmatprep.subr.mxu0 0.0
    %1026 = vmatpush1.msra.mxu0 0.0
    %1027 = vmatprep.subr.mxu0 0.0
    %1028 = vmatpush1.msra.mxu0 0.0
    %1029 = vmatprep.mubr.f32.mxu0 0.0
    %1030 = vmatmul.mubr.f32.gmra.mrb[0].mxu0 %v963
    %v1031 = vpop.f32.mrb[0].mxu0
    %v1032 = vadd.f32 0.0, %v1031
    %v1033 = vpop.f32.mrb[0].mxu0
    %1034 = vdwg.mxu0
    %v1035 = vadd.f32 %v959, %v1032
    %v1036 = vmul.f32 %v1035, %v193
    %v1037 = vtanh.pop %v1036
    %v1038 = vmul.f32 %v1037, %v193
    %v1039 = vadd.f32 %v1038, %v194
    %v1040 = vmul.f32 %v1039, %v942
    %1042 = vrot.lane.b32.xlu0 %v1039, 64
    %v1043 = vpop.permute.xlu0 %1042
    %v1045 = vmul.f32 %v1039, %v1043
    %1047 = vrot.lane.b32.xlu0 %v1045, 32
    %v1048 = vpop.permute.xlu0 %1047
    %v1050 = vadd.f32 %v1040, %v1048
    %v1051 = vtanh.pop %v1050
    %1053 = vrot.lane.b32.xlu0 %v1051, 64
    %v1054 = vpop.permute.xlu0 %1053
    %v1056 = vmul.f32 %v1039, %v1054
    %s1057 = sadd.s32 %s195, 7
    %v1058 = vstv %s1057
    %vm1059 = vcmp.lt.s32.totalorder %v1058, %v187
    %v1060 = vsel %vm1059, 1, 0
    %1061 = vset.pattern.permute.xlu0 0
    %1062 = vperm.xlu0 %1061, %v1060
    %v1063 = vpop.permute.xlu0 %1062
    %vm1064 = vcmp.eq.s32.totalorder %v1063, 1
    %v1065 = vsel %vm1064, %v1056, %v957
    %1067 = vrot.lane.b32.xlu0 %v1065, 32
    %v1068 = vpop.permute.xlu0 %1067
    %1070 = vst.msk [vmem:[#allocation4] sm:$0xff] %vm199, %v1068
    %1072 = vrot.lane.b32.xlu0 %v1050, 96
    %v1073 = vpop.permute.xlu0 %1072
    %1075 = vst.msk [vmem:[#allocation3] sm:$0xff] %vm199, %v1073
    // Predicated region
    $region26: #{tpu_custom_call.1} parent=1 // pred_check
      _
    $region27: #{tpu_custom_call.1} parent=1 // pred_check_branch
      %1077 = sbr.rel (0) target = $region29
    $region28: #{tpu_custom_call.1} parent=1 // pred_region
      %s1079 = ssub.s32 128, 128
      %1080 = vsyncadd [#allocation5], %s1079
      %s1082 = sshll.u32 [#allocation4], 4
      %s1083 = int_to_ptr.vmem [resolvable:$true] %s1082
      %1085 = dma.vmem_to_hbm [thread:$0]  %s1083, 128, %s5, [#allocation5]
    $region29: #{tpu_custom_call.1} parent=1 // pred_fallthru
      _
    // Predicated region
    $region30: #{tpu_custom_call.1} parent=1 // pred_check
      _
    $region31: #{tpu_custom_call.1} parent=1 // pred_check_branch
      %1087 = sbr.rel (0) target = $region33
    $region32: #{tpu_custom_call.1} parent=1 // pred_region
      %1088 = dma.done [#allocation5], 128
    $region33: #{tpu_custom_call.1} parent=1 // pred_fallthru
      _
    %1089 = vsyncpa [#allocation5], 1

</llo_original>
